<compile_context>
chip_gen: v6e
topology: v6e:2x2x1
jax: 0.10.0
libtpu: 0.0.40
codegen_flags: <defaults>
</compile_context>

<pallas_src>
import math
from functools import partial

import jax
import jax.numpy as jnp
from jax.experimental import pallas as pl
from jax.experimental.pallas import tpu as pltpu


def _round_up(x, m):
    return (x + m - 1) // m * m


def _sublane(dtype):
    # Native sublane tile per element width: f32 -> 8, bf16 -> 16, int8/fp8 -> 32.
    return {4: 8, 2: 16, 1: 32}.get(jnp.dtype(dtype).itemsize, 8)


def _resblock_kernel(x_ref, gamma_ref, beta_ref, w1_ref, b1_ref, w2_ref, b2_ref,
                     o_ref, xn_ref, acc_ref, *, eps, valid_c, approx_gelu,
                     mxu_dtype):
    j = pl.program_id(1)

    @pl.when(j == 0)
    def _():
        x = x_ref[...].astype(jnp.float32)                    # [tile, C_pad]
        inv_c = 1.0 / float(valid_c)
        # Padded lanes of x are zero, so full-lane sums equal valid-lane sums;
        # E[x^2] - mean^2 avoids the masked centered-difference VPU passes.
        mean = jnp.sum(x, axis=-1, keepdims=True) * inv_c
        ex2 = jnp.sum(x * x, axis=-1, keepdims=True) * inv_c
        var = jnp.maximum(ex2 - mean * mean, 0.0)
        xn = (x - mean) * jax.lax.rsqrt(var + eps)
        # gamma/beta are zero-padded -> padded lanes of the affine output are 0.
        xn_ref[...] = (xn * gamma_ref[...].astype(jnp.float32)
                       + beta_ref[...].astype(jnp.float32))
        acc_ref[...] = jnp.zeros_like(acc_ref)

    # Linear 1 (this hidden tile) -> GELU -> partial Linear 2, f32 accumulate.
    # Weights are pre-cast to the MXU dtype in the wrapper; activations are
    # cast per step (f32 scratch keeps the residual exact).
    h = jnp.dot(xn_ref[...].astype(mxu_dtype), w1_ref[...],
                preferred_element_type=jnp.float32)
    h = h + b1_ref[...].astype(jnp.float32)
    if approx_gelu:
        h = jax.nn.gelu(h, approximate=True)                  # tanh -> EUP slot
    else:                                                     # nn.GELU(): exact erf
        h = 0.5 * h * (1.0 + jax.lax.erf(h * (1.0 / math.sqrt(2.0))))
    acc_ref[...] += jnp.dot(h.astype(mxu_dtype), w2_ref[...],
                            preferred_element_type=jnp.float32)

    @pl.when(j == pl.num_programs(1) - 1)
    def _():
        y = acc_ref[...] + b2_ref[...].astype(jnp.float32)
        # Residual is added to the *normalized* (affine) x, matching PyTorch.
        o_ref[...] = (xn_ref[...] + y).astype(o_ref.dtype)


def _prepare_params(gamma, beta, w1, b1, w2, b2, *, c, c_pad, mxu_dtype):
    """Pad channel dims to c_pad and cast the CxC weights to the MXU dtype.
    NOTE: for a hot path call this once and cache the result (each pad/cast is
    a full HBM round trip)."""
    pad_c = c_pad - c

    def vec(v):
        v = v.reshape(1, c)
        return jnp.pad(v, ((0, 0), (0, pad_c))) if pad_c else v

    def mat(w):
        w = w.astype(mxu_dtype)
        return jnp.pad(w, ((0, pad_c), (0, pad_c))) if pad_c else w

    return vec(gamma), vec(beta), mat(w1), vec(b1), mat(w2), vec(b2)


def simple_res_block(x, gamma, beta, w1, b1, w2, b2, *, eps=1e-5,
                     row_tile=None, hidden_tile=None, approx_gelu=False,
                     mxu_dtype=None):
    """x: (..., C).  w1, w2 are stored as (C_in, C_out) (i.e. PyTorch weight.T)."""
    orig_shape = x.shape
    C = orig_shape[-1]
    x2 = x.reshape(-1, C)
    N = x2.shape[0]

    # MXU operand dtype: bf16 by default (full-rate MXU on every chip and the
    # only float matmul path on v7x); pass jnp.float32 for exact f32 matmuls.
    if mxu_dtype is None:
        mxu_dtype = jnp.bfloat16
    mxu_dtype = jnp.dtype(mxu_dtype)

    sub = _sublane(x.dtype)
    C_pad = _round_up(C, 128)
    x_item = jnp.dtype(x.dtype).itemsize
    w_item = mxu_dtype.itemsize

    # VMEM budget from the actual chip (128 MiB v5e/v6e, 64 MiB v7x), with
    # headroom for compiler-internal scratch.
    try:
        cap = int(pltpu.get_tpu_info().vmem_capacity_bytes)
    except Exception:
        cap = 64 * 1024 * 1024
    usable = int(cap * 0.84)

    # Hidden (feature) tile for the two CxC weights: full residency when both
    # fit comfortably, otherwise stream tiles over a second grid axis.
    if hidden_tile is None:
        if 2 * C_pad * C_pad * w_item <= usable // 3:
            hidden_tile = C_pad
        else:
            hidden_tile = 128
            for cand in (512, 256):
                if C_pad % cand == 0 and 2 * 2 * C_pad * cand * w_item <= usable // 3:
                    hidden_tile = cand
                    break
    hidden_tile = min(hidden_tile, C_pad)
    assert C_pad % hidden_tile == 0, "hidden_tile must divide the padded channel dim"
    nh = C_pad // hidden_tile
    weights_resident = (nh == 1)

    # Row tile: as large as VMEM allows (amortizes per-step overhead), rounded
    # to the dtype's sublane tile, split so the parallel axis has >= 2 steps
    # when N allows (v7x megacore).
    if row_tile is None:
        row_tile = 512
    row_tile = max(sub, _round_up(min(row_tile, _round_up(N, sub)), sub))
    if N > sub and -(-N // row_tile) < 2:
        row_tile = _round_up(-(-N // 2), sub)

    def vmem_needed(rt):
        return (2 * 2 * rt * C_pad * x_item                            # x/out, dbl-buffered
                + (1 if weights_resident else 2) * 2 * C_pad * hidden_tile * w_item
                + 2 * rt * C_pad * 4                                    # xn + acc scratch
                + 4 * rt * max(C_pad, hidden_tile) * 4                  # f32 temporaries
                + 8 * C_pad * 4)                                        # bias/affine vectors
    while row_tile > sub and vmem_needed(row_tile) > usable:
        row_tile = max(sub, _round_up(row_tile // 2, sub))
    N_pad = _round_up(N, row_tile)

    pad_n, pad_c = N_pad - N, C_pad - C
    if pad_n or pad_c:
        x2 = jnp.pad(x2, ((0, pad_n), (0, pad_c)))

    gamma2, beta2, w1p, b1_2, w2p, b2_2 = _prepare_params(
        gamma, beta, w1, b1, w2, b2, c=C, c_pad=C_pad, mxu_dtype=mxu_dtype)

    grid = (N_pad // row_tile, nh)

    # Advisory cost estimate for the XLA scheduler.
    flops = 4 * N_pad * C_pad * C_pad + 24 * N_pad * C_pad
    bytes_accessed = (2 * N_pad * C_pad * x_item
                      + 2 * C_pad * C_pad * w_item + 6 * C_pad * 4)
    cost = pl.CostEstimate(flops=int(flops),
                           transcendentals=int(N_pad * C_pad),
                           bytes_accessed=int(bytes_accessed))

    vmem_limit = int(min(max(vmem_needed(row_tile) * 5 // 4, 32 * 1024 * 1024),
                         usable))

    kernel = partial(_resblock_kernel, eps=eps, valid_c=C,
                     approx_gelu=approx_gelu, mxu_dtype=mxu_dtype)

    def call(single_buffer_invariant):
        def spec(shape, imap, invariant=False):
            if single_buffer_invariant and invariant:
                return pl.BlockSpec(shape, imap, pipeline_mode=pl.Buffered(1))
            return pl.BlockSpec(shape, imap)

        in_specs = [
            spec((row_tile, C_pad), lambda i, j: (i, 0)),                      # x
            spec((1, C_pad), lambda i, j: (0, 0), invariant=True),             # gamma
            spec((1, C_pad), lambda i, j: (0, 0), invariant=True),             # beta
            spec((C_pad, hidden_tile), lambda i, j: (0, j),
                 invariant=weights_resident),                                  # w1
            spec((1, hidden_tile), lambda i, j: (0, j),
                 invariant=weights_resident),                                  # b1
            spec((hidden_tile, C_pad), lambda i, j: (j, 0),
                 invariant=weights_resident),                                  # w2
            spec((1, C_pad), lambda i, j: (0, 0), invariant=True),             # b2
        ]
        out_specs = pl.BlockSpec((row_tile, C_pad), lambda i, j: (i, 0))

        return pl.pallas_call(
            kernel,
            out_shape=jax.ShapeDtypeStruct((N_pad, C_pad), x.dtype),
            grid_spec=pltpu.PrefetchScalarGridSpec(
                num_scalar_prefetch=0,
                grid=grid,
                in_specs=in_specs,
                out_specs=out_specs,
                scratch_shapes=[pltpu.VMEM((row_tile, C_pad), jnp.float32),  # xn
                                pltpu.VMEM((row_tile, C_pad), jnp.float32)]  # y acc
            ),
            compiler_params=pltpu.CompilerParams(
                dimension_semantics=("parallel", "arbitrary"),
                vmem_limit_bytes=vmem_limit),
            cost_estimate=cost,
        )(x2, gamma2, beta2, w1p, b1_2, w2p, b2_2)

    try:
        out = call(True)
    except Exception:
        # jax version without pipeline_mode / Buffered(1): default buffering.
        out = call(False)

    if pad_n or pad_c:
        out = out[:N, :C]
    return out.reshape(orig_shape)


def _reference(x, gamma, beta, w1, b1, w2, b2, eps=1e-5):
    x = x.astype(jnp.float32)
    mean = jnp.mean(x, axis=-1, keepdims=True)
    var = jnp.mean(jnp.square(x - mean), axis=-1, keepdims=True)
    xn = (x - mean) * jax.lax.rsqrt(var + eps) * gamma + beta
    h = xn @ w1 + b1
    h = 0.5 * h * (1.0 + jax.lax.erf(h / math.sqrt(2.0)))
    y = h @ w2 + b2
    return xn + y


if __name__ == "__main__":
    key = jax.random.PRNGKey(0)
    B, S, C = 2, 8, 32   # (batch, seq, channels); LayerNorm/Linear act on C

    k = jax.random.split(key, 7)
    x = jax.random.normal(k[0], (B, S, C), dtype=jnp.float32)

    # LayerNorm params (PyTorch init: ones / zeros) — perturbed slightly so the
    # affine path is exercised, deterministically.
    gamma = 1.0 + 0.01 * jax.random.normal(k[1], (C,), dtype=jnp.float32)
    beta = 0.01 * jax.random.normal(k[2], (C,), dtype=jnp.float32)

    # Linear weights, stored as (C_in, C_out) (i.e. PyTorch weight.T).
    scale = 1.0 / math.sqrt(C)
    w1 = jax.random.uniform(k[3], (C, C), minval=-scale, maxval=scale, dtype=jnp.float32)
    b1 = jax.random.uniform(k[4], (C,), minval=-scale, maxval=scale, dtype=jnp.float32)
    w2 = jax.random.uniform(k[5], (C, C), minval=-scale, maxval=scale, dtype=jnp.float32)
    b2 = jax.random.uniform(k[6], (C,), minval=-scale, maxval=scale, dtype=jnp.float32)

    ref = _reference(x, gamma, beta, w1, b1, w2, b2)

    # 1) exact f32 matmul path — bit-faithful to the PyTorch module.
    out = simple_res_block(x, gamma, beta, w1, b1, w2, b2, mxu_dtype=jnp.float32)
    out = jax.block_until_ready(out)
    assert out.shape == x.shape
    assert jnp.allclose(out, ref, atol=1e-5, rtol=1e-5), "f32 mismatch vs reference"

    # 2) default path — bf16 MXU operands, f32 accumulate / LayerNorm / GELU.
    out_bf = simple_res_block(x, gamma, beta, w1, b1, w2, b2)
    out_bf = jax.block_until_ready(out_bf)
    assert jnp.allclose(out_bf, ref, atol=5e-2, rtol=5e-2), "bf16-MXU mismatch vs reference"

    # 3) hidden-dim-tiled (streamed weights) path, forced at a small shape:
    #    C=200 -> C_pad=256, hidden_tile=128 -> 2 accumulation steps.
    C2 = 200
    k2 = jax.random.split(jax.random.PRNGKey(1), 7)
    x_b = jax.random.normal(k2[0], (B, S, C2), dtype=jnp.float32)
    gamma_b = 1.0 + 0.01 * jax.random.normal(k2[1], (C2,), dtype=jnp.float32)
    beta_b = 0.01 * jax.random.normal(k2[2], (C2,), dtype=jnp.float32)
    scale2 = 1.0 / math.sqrt(C2)
    w1_b = jax.random.uniform(k2[3], (C2, C2), minval=-scale2, maxval=scale2, dtype=jnp.float32)
    b1_b = jax.random.uniform(k2[4], (C2,), minval=-scale2, maxval=scale2, dtype=jnp.float32)
    w2_b = jax.random.uniform(k2[5], (C2, C2), minval=-scale2, maxval=scale2, dtype=jnp.float32)
    b2_b = jax.random.uniform(k2[6], (C2,), minval=-scale2, maxval=scale2, dtype=jnp.float32)
    ref2 = _reference(x_b, gamma_b, beta_b, w1_b, b1_b, w2_b, b2_b)
    out2 = simple_res_block(x_b, gamma_b, beta_b, w1_b, b1_b, w2_b, b2_b,
                            mxu_dtype=jnp.float32, hidden_tile=128)
    out2 = jax.block_until_ready(out2)
    assert jnp.allclose(out2, ref2, atol=1e-4, rtol=1e-4), "hidden-tiled mismatch vs reference"

    # 4) bf16 inputs + bf16 weights (native bf16 end to end); loose tolerance.
    out3 = simple_res_block(x.astype(jnp.bfloat16), gamma, beta,
                            w1.astype(jnp.bfloat16), b1,
                            w2.astype(jnp.bfloat16), b2)
    out3 = jax.block_until_ready(out3)
    assert jnp.allclose(out3.astype(jnp.float32), ref, atol=1e-1, rtol=1e-1), \
        "bf16 mismatch vs reference"

    print("KERNEL_OK")
</pallas_src>

<mosaic_0001>
module attributes {stable_mosaic.version = 11 : i64} {
  func.func @_resblock_kernel(%arg0: i32, %arg1: i32, %arg2: memref<8x128xf32, #tpu.memory_space<vmem>>, %arg3: memref<1x128xf32, #tpu.memory_space<vmem>>, %arg4: memref<1x128xf32, #tpu.memory_space<vmem>>, %arg5: memref<128x128xf32, #tpu.memory_space<vmem>>, %arg6: memref<1x128xf32, #tpu.memory_space<vmem>>, %arg7: memref<128x128xf32, #tpu.memory_space<vmem>>, %arg8: memref<1x128xf32, #tpu.memory_space<vmem>>, %arg9: memref<8x128xf32, #tpu.memory_space<vmem>>, %arg10: memref<8x128xf32, #tpu.memory_space<vmem>>, %arg11: memref<8x128xf32, #tpu.memory_space<vmem>>) attributes {dimension_semantics = [#tpu.dimension_semantics<parallel>, #tpu.dimension_semantics<arbitrary>], iteration_bounds = array<i64: 2, 1>, scalar_prefetch = 0 : i64, scratch_operands = 2 : i64, tpu.core_type = #tpu.core_type<tc>, window_params = [{transform_indices = @transform_0, window_bounds = array<i64: 8, 128>}, {pipeline_mode = #tpu.pipeline_mode<synchronous>, transform_indices = @transform_1, window_bounds = array<i64: 1, 128>}, {pipeline_mode = #tpu.pipeline_mode<synchronous>, transform_indices = @transform_2, window_bounds = array<i64: 1, 128>}, {pipeline_mode = #tpu.pipeline_mode<synchronous>, transform_indices = @transform_3, window_bounds = array<i64: 128, 128>}, {pipeline_mode = #tpu.pipeline_mode<synchronous>, transform_indices = @transform_4, window_bounds = array<i64: 1, 128>}, {pipeline_mode = #tpu.pipeline_mode<synchronous>, transform_indices = @transform_5, window_bounds = array<i64: 128, 128>}, {pipeline_mode = #tpu.pipeline_mode<synchronous>, transform_indices = @transform_6, window_bounds = array<i64: 1, 128>}, {transform_indices = @transform_7, window_bounds = array<i64: 8, 128>}]} {
    %c0_i32 = arith.constant 0 : i32
    %0 = arith.cmpi eq, %arg1, %c0_i32 : i32
    %1 = arith.extui %0 : i1 to i32
    %c0_i32_0 = arith.constant 0 : i32
    %2 = arith.cmpi ne, %1, %c0_i32_0 : i32
    scf.if %2 {
      %c0_18 = arith.constant 0 : index
      %c0_19 = arith.constant 0 : index
      %25 = vector.load %arg2[%c0_18, %c0_19] : memref<8x128xf32, #tpu.memory_space<vmem>>, vector<8x128xf32>
      %cst_20 = arith.constant dense<0.000000e+00> : vector<8xf32>
      %26 = vector.multi_reduction <add>, %25, %cst_20 [1] : vector<8x128xf32> to vector<8xf32>
      %27 = vector.shape_cast %26 : vector<8xf32> to vector<8x1xf32>
      %cst_21 = arith.constant 3.125000e-02 : f32
      %28 = vector.broadcast %cst_21 : f32 to vector<8x1xf32>
      %29 = arith.mulf %27, %28 : vector<8x1xf32>
      %30 = arith.mulf %25, %25 : vector<8x128xf32>
      %cst_22 = arith.constant dense<0.000000e+00> : vector<8xf32>
      %31 = vector.multi_reduction <add>, %30, %cst_22 [1] : vector<8x128xf32> to vector<8xf32>
      %32 = vector.shape_cast %31 : vector<8xf32> to vector<8x1xf32>
      %cst_23 = arith.constant 3.125000e-02 : f32
      %33 = vector.broadcast %cst_23 : f32 to vector<8x1xf32>
      %34 = arith.mulf %32, %33 : vector<8x1xf32>
      %35 = arith.mulf %29, %29 : vector<8x1xf32>
      %36 = arith.subf %34, %35 : vector<8x1xf32>
      %cst_24 = arith.constant 0.000000e+00 : f32
      %37 = vector.broadcast %cst_24 : f32 to vector<8x1xf32>
      %38 = arith.maximumf %36, %37 : vector<8x1xf32>
      %39 = vector.broadcast %29 : vector<8x1xf32> to vector<8x128xf32>
      %40 = arith.subf %25, %39 : vector<8x128xf32>
      %cst_25 = arith.constant 9.99999974E-6 : f32
      %41 = vector.broadcast %cst_25 : f32 to vector<8x1xf32>
      %42 = arith.addf %38, %41 : vector<8x1xf32>
      %43 = math.rsqrt %42 : vector<8x1xf32>
      %44 = vector.broadcast %43 : vector<8x1xf32> to vector<8x128xf32>
      %45 = arith.mulf %40, %44 : vector<8x128xf32>
      %c0_26 = arith.constant 0 : index
      %c0_27 = arith.constant 0 : index
      %46 = vector.load %arg3[%c0_26, %c0_27] : memref<1x128xf32, #tpu.memory_space<vmem>>, vector<1x128xf32>
      %47 = vector.broadcast %46 : vector<1x128xf32> to vector<8x128xf32>
      %48 = arith.mulf %45, %47 : vector<8x128xf32>
      %c0_28 = arith.constant 0 : index
      %c0_29 = arith.constant 0 : index
      %49 = vector.load %arg4[%c0_28, %c0_29] : memref<1x128xf32, #tpu.memory_space<vmem>>, vector<1x128xf32>
      %50 = vector.broadcast %49 : vector<1x128xf32> to vector<8x128xf32>
      %51 = arith.addf %48, %50 : vector<8x128xf32>
      %c0_30 = arith.constant 0 : index
      %c0_31 = arith.constant 0 : index
      %52 = vector.load %arg10[%c0_30, %c0_31] : memref<8x128xf32, #tpu.memory_space<vmem>>, vector<8x128xf32>
      tpu.vector_store %arg10[%c0_30, %c0_31], %51 {strides = array<i32>} : memref<8x128xf32, #tpu.memory_space<vmem>>, vector<8x128xf32>,
      %cst_32 = arith.constant 0.000000e+00 : f32
      %53 = vector.broadcast %cst_32 : f32 to vector<8x128xf32>
      %c0_33 = arith.constant 0 : index
      %c0_34 = arith.constant 0 : index
      %54 = vector.load %arg11[%c0_33, %c0_34] : memref<8x128xf32, #tpu.memory_space<vmem>>, vector<8x128xf32>
      tpu.vector_store %arg11[%c0_33, %c0_34], %53 {strides = array<i32>} : memref<8x128xf32, #tpu.memory_space<vmem>>, vector<8x128xf32>,
    } else {
    }
    %c0 = arith.constant 0 : index
    %c0_1 = arith.constant 0 : index
    %3 = vector.load %arg10[%c0, %c0_1] : memref<8x128xf32, #tpu.memory_space<vmem>>, vector<8x128xf32>
    %c0_2 = arith.constant 0 : index
    %c0_3 = arith.constant 0 : index
    %4 = vector.load %arg5[%c0_2, %c0_3] : memref<128x128xf32, #tpu.memory_space<vmem>>, vector<128x128xf32>
    %cst = arith.constant dense<0.000000e+00> : vector<8x128xf32>
    %5 = tpu.matmul %3, %4, %cst {dimension_numbers = #tpu.dot_dimension_numbers<[1], [0], [0], [1], [0, 0, 1, 1], [], []>} : vector<8x128xf32>, vector<128x128xf32>, vector<8x128xf32> -> vector<8x128xf32>
    %c0_4 = arith.constant 0 : index
    %c0_5 = arith.constant 0 : index
    %6 = vector.load %arg6[%c0_4, %c0_5] : memref<1x128xf32, #tpu.memory_space<vmem>>, vector<1x128xf32>
    %7 = vector.broadcast %6 : vector<1x128xf32> to vector<8x128xf32>
    %8 = arith.addf %5, %7 : vector<8x128xf32>
    %cst_6 = arith.constant 5.000000e-01 : f32
    %9 = vector.broadcast %cst_6 : f32 to vector<8x128xf32>
    %10 = arith.mulf %9, %8 : vector<8x128xf32>
    %cst_7 = arith.constant 0.707106769 : f32
    %11 = vector.broadcast %cst_7 : f32 to vector<8x128xf32>
    %12 = arith.mulf %8, %11 : vector<8x128xf32>
    %13 = math.erf %12 : vector<8x128xf32>
    %cst_8 = arith.constant 1.000000e+00 : f32
    %14 = vector.broadcast %cst_8 : f32 to vector<8x128xf32>
    %15 = arith.addf %14, %13 : vector<8x128xf32>
    %16 = arith.mulf %10, %15 : vector<8x128xf32>
    %c0_9 = arith.constant 0 : index
    %c0_10 = arith.constant 0 : index
    %17 = vector.load %arg11[%c0_9, %c0_10] : memref<8x128xf32, #tpu.memory_space<vmem>>, vector<8x128xf32>
    %c0_11 = arith.constant 0 : index
    %c0_12 = arith.constant 0 : index
    %18 = vector.load %arg7[%c0_11, %c0_12] : memref<128x128xf32, #tpu.memory_space<vmem>>, vector<128x128xf32>
    %cst_13 = arith.constant dense<0.000000e+00> : vector<8x128xf32>
    %19 = tpu.matmul %16, %18, %cst_13 {dimension_numbers = #tpu.dot_dimension_numbers<[1], [0], [0], [1], [0, 0, 1, 1], [], []>} : vector<8x128xf32>, vector<128x128xf32>, vector<8x128xf32> -> vector<8x128xf32>
    %20 = arith.addf %17, %19 : vector<8x128xf32>
    %c0_14 = arith.constant 0 : index
    %c0_15 = arith.constant 0 : index
    %21 = vector.load %arg11[%c0_14, %c0_15] : memref<8x128xf32, #tpu.memory_space<vmem>>, vector<8x128xf32>
    tpu.vector_store %arg11[%c0_14, %c0_15], %20 {strides = array<i32>} : memref<8x128xf32, #tpu.memory_space<vmem>>, vector<8x128xf32>,
    %c0_i32_16 = arith.constant 0 : i32
    %22 = arith.cmpi eq, %arg1, %c0_i32_16 : i32
    %23 = arith.extui %22 : i1 to i32
    %c0_i32_17 = arith.constant 0 : i32
    %24 = arith.cmpi ne, %23, %c0_i32_17 : i32
    scf.if %24 {
      %c0_18 = arith.constant 0 : index
      %c0_19 = arith.constant 0 : index
      %25 = vector.load %arg11[%c0_18, %c0_19] : memref<8x128xf32, #tpu.memory_space<vmem>>, vector<8x128xf32>
      %c0_20 = arith.constant 0 : index
      %c0_21 = arith.constant 0 : index
      %26 = vector.load %arg8[%c0_20, %c0_21] : memref<1x128xf32, #tpu.memory_space<vmem>>, vector<1x128xf32>
      %27 = vector.broadcast %26 : vector<1x128xf32> to vector<8x128xf32>
      %28 = arith.addf %25, %27 : vector<8x128xf32>
      %c0_22 = arith.constant 0 : index
      %c0_23 = arith.constant 0 : index
      %29 = vector.load %arg10[%c0_22, %c0_23] : memref<8x128xf32, #tpu.memory_space<vmem>>, vector<8x128xf32>
      %30 = arith.addf %29, %28 : vector<8x128xf32>
      %c0_24 = arith.constant 0 : index
      %c0_25 = arith.constant 0 : index
      %31 = vector.load %arg9[%c0_24, %c0_25] : memref<8x128xf32, #tpu.memory_space<vmem>>, vector<8x128xf32>
      tpu.vector_store %arg9[%c0_24, %c0_25], %30 {strides = array<i32>} : memref<8x128xf32, #tpu.memory_space<vmem>>, vector<8x128xf32>,
    } else {
    }
    return
  }
  func.func @transform_0(%arg0: i32, %arg1: i32) -> (i32, i32) {
    %c0_i32 = arith.constant 0 : i32
    %c0_i32_0 = arith.constant 0 : i32
    return %arg0, %c0_i32 : i32, i32
  }
  func.func @transform_1(%arg0: i32, %arg1: i32) -> (i32, i32) {
    %c0_i32 = arith.constant 0 : i32
    %c0_i32_0 = arith.constant 0 : i32
    %c0_i32_1 = arith.constant 0 : i32
    return %c0_i32, %c0_i32_0 : i32, i32
  }
  func.func @transform_2(%arg0: i32, %arg1: i32) -> (i32, i32) {
    %c0_i32 = arith.constant 0 : i32
    %c0_i32_0 = arith.constant 0 : i32
    %c0_i32_1 = arith.constant 0 : i32
    return %c0_i32, %c0_i32_0 : i32, i32
  }
  func.func @transform_3(%arg0: i32, %arg1: i32) -> (i32, i32) {
    %c0_i32 = arith.constant 0 : i32
    %c0_i32_0 = arith.constant 0 : i32
    return %c0_i32, %arg1 : i32, i32
  }
  func.func @transform_4(%arg0: i32, %arg1: i32) -> (i32, i32) {
    %c0_i32 = arith.constant 0 : i32
    %c0_i32_0 = arith.constant 0 : i32
    return %c0_i32, %arg1 : i32, i32
  }
  func.func @transform_5(%arg0: i32, %arg1: i32) -> (i32, i32) {
    %c0_i32 = arith.constant 0 : i32
    %c0_i32_0 = arith.constant 0 : i32
    return %arg1, %c0_i32 : i32, i32
  }
  func.func @transform_6(%arg0: i32, %arg1: i32) -> (i32, i32) {
    %c0_i32 = arith.constant 0 : i32
    %c0_i32_0 = arith.constant 0 : i32
    %c0_i32_1 = arith.constant 0 : i32
    return %c0_i32, %c0_i32_0 : i32, i32
  }
  func.func @transform_7(%arg0: i32, %arg1: i32) -> (i32, i32) {
    %c0_i32 = arith.constant 0 : i32
    %c0_i32_0 = arith.constant 0 : i32
    return %arg0, %c0_i32 : i32, i32
  }
}

module attributes {stable_mosaic.version = 11 : i64} {
  func.func @_resblock_kernel(%arg0: i32, %arg1: i32, %arg2: memref<8x128xf32, #tpu.memory_space<vmem>>, %arg3: memref<1x128xf32, #tpu.memory_space<vmem>>, %arg4: memref<1x128xf32, #tpu.memory_space<vmem>>, %arg5: memref<128x128xf32, #tpu.memory_space<vmem>>, %arg6: memref<1x128xf32, #tpu.memory_space<vmem>>, %arg7: memref<128x128xf32, #tpu.memory_space<vmem>>, %arg8: memref<1x128xf32, #tpu.memory_space<vmem>>, %arg9: memref<8x128xf32, #tpu.memory_space<vmem>>, %arg10: memref<8x128xf32, #tpu.memory_space<vmem>>, %arg11: memref<8x128xf32, #tpu.memory_space<vmem>>) attributes {dimension_semantics = [#tpu.dimension_semantics<parallel>, #tpu.dimension_semantics<arbitrary>], iteration_bounds = array<i64: 2, 1>, scalar_prefetch = 0 : i64, scratch_operands = 2 : i64, tpu.core_type = #tpu.core_type<tc>, window_params = [{transform_indices = @transform_0, window_bounds = array<i64: 8, 128>}, {pipeline_mode = #tpu.pipeline_mode<synchronous>, transform_indices = @transform_1, window_bounds = array<i64: 1, 128>}, {pipeline_mode = #tpu.pipeline_mode<synchronous>, transform_indices = @transform_2, window_bounds = array<i64: 1, 128>}, {transform_indices = @transform_3, window_bounds = array<i64: 128, 128>}, {transform_indices = @transform_4, window_bounds = array<i64: 1, 128>}, {transform_indices = @transform_5, window_bounds = array<i64: 128, 128>}, {pipeline_mode = #tpu.pipeline_mode<synchronous>, transform_indices = @transform_6, window_bounds = array<i64: 1, 128>}, {transform_indices = @transform_7, window_bounds = array<i64: 8, 128>}]} {
    %c0_i32 = arith.constant 0 : i32
    %0 = arith.cmpi eq, %arg1, %c0_i32 : i32
    %1 = arith.extui %0 : i1 to i32
    %c0_i32_0 = arith.constant 0 : i32
    %2 = arith.cmpi ne, %1, %c0_i32_0 : i32
    scf.if %2 {
      %c0_18 = arith.constant 0 : index
      %c0_19 = arith.constant 0 : index
      %25 = vector.load %arg2[%c0_18, %c0_19] : memref<8x128xf32, #tpu.memory_space<vmem>>, vector<8x128xf32>
      %cst_20 = arith.constant dense<0.000000e+00> : vector<8xf32>
      %26 = vector.multi_reduction <add>, %25, %cst_20 [1] : vector<8x128xf32> to vector<8xf32>
      %27 = vector.shape_cast %26 : vector<8xf32> to vector<8x1xf32>
      %cst_21 = arith.constant 3.125000e-02 : f32
      %28 = vector.broadcast %cst_21 : f32 to vector<8x1xf32>
      %29 = arith.mulf %27, %28 : vector<8x1xf32>
      %30 = arith.mulf %25, %25 : vector<8x128xf32>
      %cst_22 = arith.constant dense<0.000000e+00> : vector<8xf32>
      %31 = vector.multi_reduction <add>, %30, %cst_22 [1] : vector<8x128xf32> to vector<8xf32>
      %32 = vector.shape_cast %31 : vector<8xf32> to vector<8x1xf32>
      %cst_23 = arith.constant 3.125000e-02 : f32
      %33 = vector.broadcast %cst_23 : f32 to vector<8x1xf32>
      %34 = arith.mulf %32, %33 : vector<8x1xf32>
      %35 = arith.mulf %29, %29 : vector<8x1xf32>
      %36 = arith.subf %34, %35 : vector<8x1xf32>
      %cst_24 = arith.constant 0.000000e+00 : f32
      %37 = vector.broadcast %cst_24 : f32 to vector<8x1xf32>
      %38 = arith.maximumf %36, %37 : vector<8x1xf32>
      %39 = vector.broadcast %29 : vector<8x1xf32> to vector<8x128xf32>
      %40 = arith.subf %25, %39 : vector<8x128xf32>
      %cst_25 = arith.constant 9.99999974E-6 : f32
      %41 = vector.broadcast %cst_25 : f32 to vector<8x1xf32>
      %42 = arith.addf %38, %41 : vector<8x1xf32>
      %43 = math.rsqrt %42 : vector<8x1xf32>
      %44 = vector.broadcast %43 : vector<8x1xf32> to vector<8x128xf32>
      %45 = arith.mulf %40, %44 : vector<8x128xf32>
      %c0_26 = arith.constant 0 : index
      %c0_27 = arith.constant 0 : index
      %46 = vector.load %arg3[%c0_26, %c0_27] : memref<1x128xf32, #tpu.memory_space<vmem>>, vector<1x128xf32>
      %47 = vector.broadcast %46 : vector<1x128xf32> to vector<8x128xf32>
      %48 = arith.mulf %45, %47 : vector<8x128xf32>
      %c0_28 = arith.constant 0 : index
      %c0_29 = arith.constant 0 : index
      %49 = vector.load %arg4[%c0_28, %c0_29] : memref<1x128xf32, #tpu.memory_space<vmem>>, vector<1x128xf32>
      %50 = vector.broadcast %49 : vector<1x128xf32> to vector<8x128xf32>
      %51 = arith.addf %48, %50 : vector<8x128xf32>
      %c0_30 = arith.constant 0 : index
      %c0_31 = arith.constant 0 : index
      %52 = vector.load %arg10[%c0_30, %c0_31] : memref<8x128xf32, #tpu.memory_space<vmem>>, vector<8x128xf32>
      tpu.vector_store %arg10[%c0_30, %c0_31], %51 {strides = array<i32>} : memref<8x128xf32, #tpu.memory_space<vmem>>, vector<8x128xf32>,
      %cst_32 = arith.constant 0.000000e+00 : f32
      %53 = vector.broadcast %cst_32 : f32 to vector<8x128xf32>
      %c0_33 = arith.constant 0 : index
      %c0_34 = arith.constant 0 : index
      %54 = vector.load %arg11[%c0_33, %c0_34] : memref<8x128xf32, #tpu.memory_space<vmem>>, vector<8x128xf32>
      tpu.vector_store %arg11[%c0_33, %c0_34], %53 {strides = array<i32>} : memref<8x128xf32, #tpu.memory_space<vmem>>, vector<8x128xf32>,
    } else {
    }
    %c0 = arith.constant 0 : index
    %c0_1 = arith.constant 0 : index
    %3 = vector.load %arg10[%c0, %c0_1] : memref<8x128xf32, #tpu.memory_space<vmem>>, vector<8x128xf32>
    %c0_2 = arith.constant 0 : index
    %c0_3 = arith.constant 0 : index
    %4 = vector.load %arg5[%c0_2, %c0_3] : memref<128x128xf32, #tpu.memory_space<vmem>>, vector<128x128xf32>
    %cst = arith.constant dense<0.000000e+00> : vector<8x128xf32>
    %5 = tpu.matmul %3, %4, %cst {dimension_numbers = #tpu.dot_dimension_numbers<[1], [0], [0], [1], [0, 0, 1, 1], [], []>} : vector<8x128xf32>, vector<128x128xf32>, vector<8x128xf32> -> vector<8x128xf32>
    %c0_4 = arith.constant 0 : index
    %c0_5 = arith.constant 0 : index
    %6 = vector.load %arg6[%c0_4, %c0_5] : memref<1x128xf32, #tpu.memory_space<vmem>>, vector<1x128xf32>
    %7 = vector.broadcast %6 : vector<1x128xf32> to vector<8x128xf32>
    %8 = arith.addf %5, %7 : vector<8x128xf32>
    %cst_6 = arith.constant 5.000000e-01 : f32
    %9 = vector.broadcast %cst_6 : f32 to vector<8x128xf32>
    %10 = arith.mulf %9, %8 : vector<8x128xf32>
    %cst_7 = arith.constant 0.707106769 : f32
    %11 = vector.broadcast %cst_7 : f32 to vector<8x128xf32>
    %12 = arith.mulf %8, %11 : vector<8x128xf32>
    %13 = math.erf %12 : vector<8x128xf32>
    %cst_8 = arith.constant 1.000000e+00 : f32
    %14 = vector.broadcast %cst_8 : f32 to vector<8x128xf32>
    %15 = arith.addf %14, %13 : vector<8x128xf32>
    %16 = arith.mulf %10, %15 : vector<8x128xf32>
    %c0_9 = arith.constant 0 : index
    %c0_10 = arith.constant 0 : index
    %17 = vector.load %arg11[%c0_9, %c0_10] : memref<8x128xf32, #tpu.memory_space<vmem>>, vector<8x128xf32>
    %c0_11 = arith.constant 0 : index
    %c0_12 = arith.constant 0 : index
    %18 = vector.load %arg7[%c0_11, %c0_12] : memref<128x128xf32, #tpu.memory_space<vmem>>, vector<128x128xf32>
    %cst_13 = arith.constant dense<0.000000e+00> : vector<8x128xf32>
    %19 = tpu.matmul %16, %18, %cst_13 {dimension_numbers = #tpu.dot_dimension_numbers<[1], [0], [0], [1], [0, 0, 1, 1], [], []>} : vector<8x128xf32>, vector<128x128xf32>, vector<8x128xf32> -> vector<8x128xf32>
    %20 = arith.addf %17, %19 : vector<8x128xf32>
    %c0_14 = arith.constant 0 : index
    %c0_15 = arith.constant 0 : index
    %21 = vector.load %arg11[%c0_14, %c0_15] : memref<8x128xf32, #tpu.memory_space<vmem>>, vector<8x128xf32>
    tpu.vector_store %arg11[%c0_14, %c0_15], %20 {strides = array<i32>} : memref<8x128xf32, #tpu.memory_space<vmem>>, vector<8x128xf32>,
    %c0_i32_16 = arith.constant 0 : i32
    %22 = arith.cmpi eq, %arg1, %c0_i32_16 : i32
    %23 = arith.extui %22 : i1 to i32
    %c0_i32_17 = arith.constant 0 : i32
    %24 = arith.cmpi ne, %23, %c0_i32_17 : i32
    scf.if %24 {
      %c0_18 = arith.constant 0 : index
      %c0_19 = arith.constant 0 : index
      %25 = vector.load %arg11[%c0_18, %c0_19] : memref<8x128xf32, #tpu.memory_space<vmem>>, vector<8x128xf32>
      %c0_20 = arith.constant 0 : index
      %c0_21 = arith.constant 0 : index
      %26 = vector.load %arg8[%c0_20, %c0_21] : memref<1x128xf32, #tpu.memory_space<vmem>>, vector<1x128xf32>
      %27 = vector.broadcast %26 : vector<1x128xf32> to vector<8x128xf32>
      %28 = arith.addf %25, %27 : vector<8x128xf32>
      %c0_22 = arith.constant 0 : index
      %c0_23 = arith.constant 0 : index
      %29 = vector.load %arg10[%c0_22, %c0_23] : memref<8x128xf32, #tpu.memory_space<vmem>>, vector<8x128xf32>
      %30 = arith.addf %29, %28 : vector<8x128xf32>
      %c0_24 = arith.constant 0 : index
      %c0_25 = arith.constant 0 : index
      %31 = vector.load %arg9[%c0_24, %c0_25] : memref<8x128xf32, #tpu.memory_space<vmem>>, vector<8x128xf32>
      tpu.vector_store %arg9[%c0_24, %c0_25], %30 {strides = array<i32>} : memref<8x128xf32, #tpu.memory_space<vmem>>, vector<8x128xf32>,
    } else {
    }
    return
  }
  func.func @transform_0(%arg0: i32, %arg1: i32) -> (i32, i32) {
    %c0_i32 = arith.constant 0 : i32
    %c0_i32_0 = arith.constant 0 : i32
    return %arg0, %c0_i32 : i32, i32
  }
  func.func @transform_1(%arg0: i32, %arg1: i32) -> (i32, i32) {
    %c0_i32 = arith.constant 0 : i32
    %c0_i32_0 = arith.constant 0 : i32
    %c0_i32_1 = arith.constant 0 : i32
    return %c0_i32, %c0_i32_0 : i32, i32
  }
  func.func @transform_2(%arg0: i32, %arg1: i32) -> (i32, i32) {
    %c0_i32 = arith.constant 0 : i32
    %c0_i32_0 = arith.constant 0 : i32
    %c0_i32_1 = arith.constant 0 : i32
    return %c0_i32, %c0_i32_0 : i32, i32
  }
  func.func @transform_3(%arg0: i32, %arg1: i32) -> (i32, i32) {
    %c0_i32 = arith.constant 0 : i32
    %c0_i32_0 = arith.constant 0 : i32
    return %c0_i32, %arg1 : i32, i32
  }
  func.func @transform_4(%arg0: i32, %arg1: i32) -> (i32, i32) {
    %c0_i32 = arith.constant 0 : i32
    %c0_i32_0 = arith.constant 0 : i32
    return %c0_i32, %arg1 : i32, i32
  }
  func.func @transform_5(%arg0: i32, %arg1: i32) -> (i32, i32) {
    %c0_i32 = arith.constant 0 : i32
    %c0_i32_0 = arith.constant 0 : i32
    return %arg1, %c0_i32 : i32, i32
  }
  func.func @transform_6(%arg0: i32, %arg1: i32) -> (i32, i32) {
    %c0_i32 = arith.constant 0 : i32
    %c0_i32_0 = arith.constant 0 : i32
    %c0_i32_1 = arith.constant 0 : i32
    return %c0_i32, %c0_i32_0 : i32, i32
  }
  func.func @transform_7(%arg0: i32, %arg1: i32) -> (i32, i32) {
    %c0_i32 = arith.constant 0 : i32
    %c0_i32_0 = arith.constant 0 : i32
    return %arg0, %c0_i32 : i32, i32
  }
}

</mosaic_0001>

<llo_original>
// kernel: tpu_custom_call.1
$region0: #{tpu_custom_call.1}
  #allocation0 [shape = 'u32[]', space=smem, size = 0x4, offset = 0x4, fixed_abs, tag = 'smem constant byte address 0x4 - core index']
  #allocation1 [shape = 'u32[144,128]{1,0:T(1,128)}', space=vmem, size = 0x12000, scoped, tag = 'internal scratch']
  #allocation2 [shape = 'f32[8,128]{1,0:T(8,128)}', space=vmem, size = 0x1000, scoped, tag = 'scratch operand']
  #allocation3 [shape = 'f32[8,128]{1,0:T(8,128)}', space=vmem, size = 0x1000, scoped, tag = 'scratch operand']
  %s0 = inlined_call_operand.hbm [shape: f32[16,128], index: 0, kind: input, shape index: {}]
  %s1 = inlined_call_operand.vmem [shape: f32[1,128], index: 1, kind: input, shape index: {}]
  %s2 = inlined_call_operand.vmem [shape: f32[1,128], index: 2, kind: input, shape index: {}]
  %s3 = inlined_call_operand.hbm [shape: f32[128,128], index: 3, kind: input, shape index: {}]
  %s4 = inlined_call_operand.vmem [shape: f32[1,128], index: 4, kind: input, shape index: {}]
  %s5 = inlined_call_operand.hbm [shape: f32[128,128], index: 5, kind: input, shape index: {}]
  %s6 = inlined_call_operand.vmem [shape: f32[1,128], index: 6, kind: input, shape index: {}]
  %s7 = inlined_call_operand.hbm [shape: f32[16,128], index: 7, kind: output, shape index: {}]
  %s8 = sld [smem:[#allocation0]]
  $region81: #{tpu_custom_call.1} parent=0
    _
  %s10 = ssub.s32 1, %s8
  %s11 = scalar_select 0, %s10, %s8
  $region1: #{tpu_custom_call.1} parent=0
    #allocation4 [shape = 'u8[8192]{0}', space=vmem, size = 0x2000, scoped, tag = 'input window, operand 0']
    #allocation5 [shape = 's32[2]{0}', space=sflag, size = 0x8, scoped, tag = 'scoped memory for tpu_custom_call.1']
    #allocation6 [shape = 's32[2]{0}', space=sflag, size = 0x8, scoped, tag = 'scoped memory for tpu_custom_call.1']
    #allocation7 [shape = 'u8[65536]{0}', space=vmem, size = 0x10000, scoped, tag = 'input window, operand 3, single buffered']
    #allocation8 [shape = 's32[1]{0}', space=sflag, size = 0x4, scoped, tag = 'scoped memory for tpu_custom_call.1']
    #allocation9 [shape = 'u8[65536]{0}', space=vmem, size = 0x10000, scoped, tag = 'input window, operand 5, single buffered']
    #allocation10 [shape = 'u8[8192]{0}', space=vmem, size = 0x2000, scoped, tag = 'output window, operand 0']
    %12 = vsyncpa [#allocation5], 0
    %s13 = scalar_lea.sflag [#allocation5], 1
    %14 = vsyncpa %s13, 0
    %15 = vsyncpa [#allocation8], 0
    %16 = vsyncpa [#allocation6], 0
    %s17 = scalar_lea.sflag [#allocation6], 1
    %18 = vsyncpa %s17, 0
    loop: start=0, step=1, limit=4
    $region2: #{tpu_custom_call.1} parent=1 // loop_pre_header
      _
    $region3: #{tpu_custom_call.1} parent=1 // loop_header
      %s20 = sphi 0, %s24
      %p21 = scmp.ge.s32.totalorder %s20, 4
      %s27 = sphi 0, %s39
      %s28 = sphi 0, %s35
      %s29 = sphi 0, %s27
      %s30 = sphi 0, %s28
      %s31 = sphi 0, %s29
      %s32 = sphi 0, %s30
      %s42 = sphi 0, %s44
      %s45 = sphi 0, %s42
      %s46 = sphi 0, %s45
      %s62 = sphi 0, %s46
      %s66 = sphi 0, %s66
      %s68 = sphi 0, %s66
      %s69 = sphi 0, %s68
      %s83 = sphi 0, %s69
      %s87 = sphi 0, %s87
      %s89 = sphi 0, %s87
      %s90 = sphi 0, %s89
      %s104 = sphi 0, %s90
      %s110 = sphi 0, %s112
      %s113 = sphi 0, %s110
      %s114 = sphi 0, %s113
      %s130 = sphi 0, %s114
      %s136 = sphi 0, %s138
      %s139 = sphi 0, %s136
      %s140 = sphi 0, %s139
      %s156 = sphi 0, %s140
      %s162 = sphi 0, %s164
      %s165 = sphi 0, %s162
      %s166 = sphi 0, %s165
      %s182 = sphi 0, %s166
      %s186 = sphi 0, %s186
      %s188 = sphi 0, %s186
      %s189 = sphi 0, %s188
      %s203 = sphi 0, %s189
      %s209 = sphi 0, %s211
      %s212 = sphi 0, %s209
      %s213 = sphi 0, %s212
      %s229 = sphi 0, %s213
    $region4: #{tpu_custom_call.1} parent=1 // loop_header_branch
      %23 = sbr.rel (%p21) target = $region8
    $region5: #{tpu_custom_call.1} parent=1 // loop_body
      %s25 = ssub.s32 %s20, 1
      %s26 = ssub.s32 %s20, 2
      %s33 = sadd.s32 1, %s28
      %p34 = scmp.ge.s32.totalorder %s33, 1
      %s35 = scalar_select %p34, 0, %s33
      %s36 = sadd.s32 1, %s27
      %s37 = scalar_select %p34, %s36, %s27
      %p38 = scmp.ge.s32.totalorder %s37, 2
      %s39 = scalar_select %p38, 0, %s37
      %s40 = ssub.s32 %s27, %s39
      %p41 = scmp.eq.s32.totalorder %s40, 0
      %s43 = sadd.s32 %s42, 1
      %s44 = scalar_select %p41, %s42, %s43
      %p47 = pneg %p41
      %p48 = scmp.eq.s32.totalorder %s20, 1
      %p49 = por %p47, %p48
      %p50 = scmp.ne.s32.totalorder %s42, %s45
      %p51 = scmp.eq.s32.totalorder %s20, 0
      %p52 = por %p50, %p51
      %p53 = scmp.ne.s32.totalorder %s42, %s45
      %p54 = scmp.eq.s32.totalorder %s25, 1
      %p55 = por %p53, %p54
      %p56 = scmp.ne.s32.totalorder %s45, %s46
      %p57 = scmp.eq.s32.totalorder %s25, 0
      %p58 = por %p56, %p57
      %p59 = scmp.ne.s32.totalorder %s45, %s46
      %p60 = scmp.eq.s32.totalorder %s26, 1
      %p61 = por %p59, %p60
      %p63 = scmp.ne.s32.totalorder %s46, %s62
      %p64 = scmp.eq.s32.totalorder %s26, 0
      %p65 = por %p63, %p64
      %s67 = sadd.s32 %s66, 1
      %p70 = scmp.eq.s32.totalorder %s20, 1
      %p71 = scmp.ne.s32.totalorder %s66, %s68
      %p72 = scmp.eq.s32.totalorder %s20, 0
      %p73 = por %p71, %p72
      %p74 = scmp.ne.s32.totalorder %s66, %s68
      %p75 = scmp.eq.s32.totalorder %s25, 1
      %p76 = por %p74, %p75
      %p77 = scmp.ne.s32.totalorder %s68, %s69
      %p78 = scmp.eq.s32.totalorder %s25, 0
      %p79 = por %p77, %p78
      %p80 = scmp.ne.s32.totalorder %s68, %s69
      %p81 = scmp.eq.s32.totalorder %s26, 1
      %p82 = por %p80, %p81
      %p84 = scmp.ne.s32.totalorder %s69, %s83
      %p85 = scmp.eq.s32.totalorder %s26, 0
      %p86 = por %p84, %p85
      %s88 = sadd.s32 %s87, 1
      %p91 = scmp.eq.s32.totalorder %s20, 1
      %p92 = scmp.ne.s32.totalorder %s87, %s89
      %p93 = scmp.eq.s32.totalorder %s20, 0
      %p94 = por %p92, %p93
      %p95 = scmp.ne.s32.totalorder %s87, %s89
      %p96 = scmp.eq.s32.totalorder %s25, 1
      %p97 = por %p95, %p96
      %p98 = scmp.ne.s32.totalorder %s89, %s90
      %p99 = scmp.eq.s32.totalorder %s25, 0
      %p100 = por %p98, %p99
      %p101 = scmp.ne.s32.totalorder %s89, %s90
      %p102 = scmp.eq.s32.totalorder %s26, 1
      %p103 = por %p101, %p102
      %p105 = scmp.ne.s32.totalorder %s90, %s104
      %p106 = scmp.eq.s32.totalorder %s26, 0
      %p107 = por %p105, %p106
      %s108 = ssub.s32 %s28, %s35
      %p109 = scmp.eq.s32.totalorder %s108, 0
      %s111 = sadd.s32 %s110, 1
      %s112 = scalar_select %p109, %s110, %s111
      %p115 = pneg %p109
      %p116 = scmp.eq.s32.totalorder %s20, 1
      %p117 = por %p115, %p116
      %p118 = scmp.ne.s32.totalorder %s110, %s113
      %p119 = scmp.eq.s32.totalorder %s20, 0
      %p120 = por %p118, %p119
      %p121 = scmp.ne.s32.totalorder %s110, %s113
      %p122 = scmp.eq.s32.totalorder %s25, 1
      %p123 = por %p121, %p122
      %p124 = scmp.ne.s32.totalorder %s113, %s114
      %p125 = scmp.eq.s32.totalorder %s25, 0
      %p126 = por %p124, %p125
      %p127 = scmp.ne.s32.totalorder %s113, %s114
      %p128 = scmp.eq.s32.totalorder %s26, 1
      %p129 = por %p127, %p128
      %p131 = scmp.ne.s32.totalorder %s114, %s130
      %p132 = scmp.eq.s32.totalorder %s26, 0
      %p133 = por %p131, %p132
      %s134 = ssub.s32 %s28, %s35
      %p135 = scmp.eq.s32.totalorder %s134, 0
      %s137 = sadd.s32 %s136, 1
      %s138 = scalar_select %p135, %s136, %s137
      %p141 = pneg %p135
      %p142 = scmp.eq.s32.totalorder %s20, 1
      %p143 = por %p141, %p142
      %p144 = scmp.ne.s32.totalorder %s136, %s139
      %p145 = scmp.eq.s32.totalorder %s20, 0
      %p146 = por %p144, %p145
      %p147 = scmp.ne.s32.totalorder %s136, %s139
      %p148 = scmp.eq.s32.totalorder %s25, 1
      %p149 = por %p147, %p148
      %p150 = scmp.ne.s32.totalorder %s139, %s140
      %p151 = scmp.eq.s32.totalorder %s25, 0
      %p152 = por %p150, %p151
      %p153 = scmp.ne.s32.totalorder %s139, %s140
      %p154 = scmp.eq.s32.totalorder %s26, 1
      %p155 = por %p153, %p154
      %p157 = scmp.ne.s32.totalorder %s140, %s156
      %p158 = scmp.eq.s32.totalorder %s26, 0
      %p159 = por %p157, %p158
      %s160 = ssub.s32 %s28, %s35
      %p161 = scmp.eq.s32.totalorder %s160, 0
      %s163 = sadd.s32 %s162, 1
      %s164 = scalar_select %p161, %s162, %s163
      %p167 = pneg %p161
      %p168 = scmp.eq.s32.totalorder %s20, 1
      %p169 = por %p167, %p168
      %p170 = scmp.ne.s32.totalorder %s162, %s165
      %p171 = scmp.eq.s32.totalorder %s20, 0
      %p172 = por %p170, %p171
      %p173 = scmp.ne.s32.totalorder %s162, %s165
      %p174 = scmp.eq.s32.totalorder %s25, 1
      %p175 = por %p173, %p174
      %p176 = scmp.ne.s32.totalorder %s165, %s166
      %p177 = scmp.eq.s32.totalorder %s25, 0
      %p178 = por %p176, %p177
      %p179 = scmp.ne.s32.totalorder %s165, %s166
      %p180 = scmp.eq.s32.totalorder %s26, 1
      %p181 = por %p179, %p180
      %p183 = scmp.ne.s32.totalorder %s166, %s182
      %p184 = scmp.eq.s32.totalorder %s26, 0
      %p185 = por %p183, %p184
      %s187 = sadd.s32 %s186, 1
      %p190 = scmp.eq.s32.totalorder %s20, 1
      %p191 = scmp.ne.s32.totalorder %s186, %s188
      %p192 = scmp.eq.s32.totalorder %s20, 0
      %p193 = por %p191, %p192
      %p194 = scmp.ne.s32.totalorder %s186, %s188
      %p195 = scmp.eq.s32.totalorder %s25, 1
      %p196 = por %p194, %p195
      %p197 = scmp.ne.s32.totalorder %s188, %s189
      %p198 = scmp.eq.s32.totalorder %s25, 0
      %p199 = por %p197, %p198
      %p200 = scmp.ne.s32.totalorder %s188, %s189
      %p201 = scmp.eq.s32.totalorder %s26, 1
      %p202 = por %p200, %p201
      %p204 = scmp.ne.s32.totalorder %s189, %s203
      %p205 = scmp.eq.s32.totalorder %s26, 0
      %p206 = por %p204, %p205
      %s207 = ssub.s32 %s27, %s39
      %p208 = scmp.eq.s32.totalorder %s207, 0
      %s210 = sadd.s32 %s209, 1
      %s211 = scalar_select %p208, %s209, %s210
      %p214 = pneg %p208
      %p215 = scmp.eq.s32.totalorder %s20, 1
      %p216 = por %p214, %p215
      %p217 = scmp.ne.s32.totalorder %s209, %s212
      %p218 = scmp.eq.s32.totalorder %s20, 0
      %p219 = por %p217, %p218
      %p220 = scmp.ne.s32.totalorder %s209, %s212
      %p221 = scmp.eq.s32.totalorder %s25, 1
      %p222 = por %p220, %p221
      %p223 = scmp.ne.s32.totalorder %s212, %s213
      %p224 = scmp.eq.s32.totalorder %s25, 0
      %p225 = por %p223, %p224
      %p226 = scmp.ne.s32.totalorder %s212, %s213
      %p227 = scmp.eq.s32.totalorder %s26, 1
      %p228 = por %p226, %p227
      %p230 = scmp.ne.s32.totalorder %s213, %s229
      %p231 = scmp.eq.s32.totalorder %s26, 0
      %p232 = por %p230, %p231
      %p233 = scmp.le.s32.totalorder 1, %s20
      %p234 = scmp.lt.s32.totalorder %s20, 3
      %p235 = pnand %p233, %p234
      %p236 = pneg %p235
      // Predicated region
      $region9: #{tpu_custom_call.1} parent=5 // pred_check
        _
      $region10: #{tpu_custom_call.1} parent=5 // pred_check_branch
        %238 = sbr.rel (%p235) target = $region12
      $region11: #{tpu_custom_call.1} parent=5 // pred_region
        %s239 = ssub.s32 %s20, 1
        // Predicated region
        $region13: #{tpu_custom_call.1} parent=11 // pred_check
          %p240 = pneg %p79
        $region14: #{tpu_custom_call.1} parent=11 // pred_check_branch
          %242 = sbr.rel (%p240) target = $region16
        $region15: #{tpu_custom_call.1} parent=11 // pred_region
          _
        $region16: #{tpu_custom_call.1} parent=11 // pred_fallthru
          _
        // Predicated region
        $region17: #{tpu_custom_call.1} parent=11 // pred_check
          %p243 = pneg %p100
        $region18: #{tpu_custom_call.1} parent=11 // pred_check_branch
          %245 = sbr.rel (%p243) target = $region20
        $region19: #{tpu_custom_call.1} parent=11 // pred_region
          _
        $region20: #{tpu_custom_call.1} parent=11 // pred_fallthru
          _
        // Predicated region
        $region21: #{tpu_custom_call.1} parent=11 // pred_check
          %p246 = pneg %p126
        $region22: #{tpu_custom_call.1} parent=11 // pred_check_branch
          %248 = sbr.rel (%p246) target = $region24
        $region23: #{tpu_custom_call.1} parent=11 // pred_region
          %s250 = ssub.s32 2048, 2048
          %251 = vsyncadd [#allocation8], %s250
          %s252 = smul.addr %s30, 128
          %s253 = scalar_lea.hbm %s3, %s252
          %s254 = sshll.u32 [#allocation7], 4
          %s255 = int_to_ptr.vmem [resolvable:$true] %s254
          %260 = dma.hbm_to_vmem [thread:$0]  %s253, 2048, %s255, [#allocation8], 128, 128, 8
        $region24: #{tpu_custom_call.1} parent=11 // pred_fallthru
          _
        // Predicated region
        $region25: #{tpu_custom_call.1} parent=11 // pred_check
          %p261 = pneg %p152
        $region26: #{tpu_custom_call.1} parent=11 // pred_check_branch
          %263 = sbr.rel (%p261) target = $region28
        $region27: #{tpu_custom_call.1} parent=11 // pred_region
          %p264 = scmp.lt.s32.totalorder %s30, 0
          %s265 = scalar_select %p264, %s30, 0
          %s266 = scalar_lea.vmem %s4, %s265
        $region28: #{tpu_custom_call.1} parent=11 // pred_fallthru
          _
        // Predicated region
        $region29: #{tpu_custom_call.1} parent=11 // pred_check
          %p267 = pneg %p178
        $region30: #{tpu_custom_call.1} parent=11 // pred_check_branch
          %269 = sbr.rel (%p267) target = $region32
        $region31: #{tpu_custom_call.1} parent=11 // pred_region
          %s270 = smul.u32 16, %s30
          %s272 = ssub.s32 2048, 2048
          %273 = vsyncadd [#allocation8], %s272
          %s274 = smul.addr %s270, 128
          %s275 = scalar_lea.hbm %s5, %s274
          %s276 = sshll.u32 [#allocation9], 4
          %s277 = int_to_ptr.vmem [resolvable:$true] %s276
          %282 = dma.hbm_to_vmem [thread:$0]  %s275, 2048, %s277, [#allocation8], 128, 128, 8
        $region32: #{tpu_custom_call.1} parent=11 // pred_fallthru
          _
        // Predicated region
        $region33: #{tpu_custom_call.1} parent=11 // pred_check
          %p283 = pneg %p199
        $region34: #{tpu_custom_call.1} parent=11 // pred_check_branch
          %285 = sbr.rel (%p283) target = $region36
        $region35: #{tpu_custom_call.1} parent=11 // pred_region
          _
        $region36: #{tpu_custom_call.1} parent=11 // pred_fallthru
          _
      $region12: #{tpu_custom_call.1} parent=5 // pred_fallthru
        _
      %p286 = scmp.lt.s32.totalorder %s20, 2
      // Predicated region
      $region37: #{tpu_custom_call.1} parent=5 // pred_check
        %p287 = pneg %p286
      $region38: #{tpu_custom_call.1} parent=5 // pred_check_branch
        %289 = sbr.rel (%p287) target = $region40
      $region39: #{tpu_custom_call.1} parent=5 // pred_region
        // Predicated region
        $region41: #{tpu_custom_call.1} parent=39 // pred_check
          %p290 = pneg %p52
        $region42: #{tpu_custom_call.1} parent=39 // pred_check_branch
          %292 = sbr.rel (%p290) target = $region44
        $region43: #{tpu_custom_call.1} parent=39 // pred_region
          %s293 = sand.u32 %s42, 1
          %s294 = scalar_lea.sflag [#allocation5], %s293
          %s295 = sand.u32 %s42, 1
          %s296 = smul.addr %s295, 8
          %s297 = scalar_lea.vmem [#allocation4], %s296
          %s299 = ssub.s32 128, 128
          %300 = vsyncadd %s294, %s299
          %s301 = smul.addr %s27, 128
          %s302 = scalar_lea.hbm %s0, %s301
          %s304 = sshll.u32 %s297, 4
          %s305 = int_to_ptr.vmem [resolvable:$true] %s304
          %307 = dma.hbm_to_vmem [thread:$0]  %s302, 128, %s305, %s294
        $region44: #{tpu_custom_call.1} parent=39 // pred_fallthru
          _
      $region40: #{tpu_custom_call.1} parent=5 // pred_fallthru
        _
      %p308 = scmp.le.s32.totalorder 1, %s20
      %p309 = scmp.lt.s32.totalorder %s20, 3
      %p310 = pnand %p308, %p309
      %p311 = pneg %p310
      // Predicated region
      $region45: #{tpu_custom_call.1} parent=5 // pred_check
        _
      $region46: #{tpu_custom_call.1} parent=5 // pred_check_branch
        %313 = sbr.rel (%p310) target = $region48
      $region47: #{tpu_custom_call.1} parent=5 // pred_region
        %s314 = ssub.s32 %s20, 1
        %s315 = sand.u32 %s45, 1
        %s316 = scalar_lea.sflag [#allocation5], %s315
        %s317 = sand.u32 %s45, 1
        %s318 = smul.addr %s317, 8
        %s319 = scalar_lea.vmem [#allocation4], %s318
        // Predicated region
        $region49: #{tpu_custom_call.1} parent=47 // pred_check
          %p320 = pneg %p58
        $region50: #{tpu_custom_call.1} parent=47 // pred_check_branch
          %322 = sbr.rel (%p320) target = $region52
        $region51: #{tpu_custom_call.1} parent=47 // pred_region
          %323 = dma.done %s316, 128
        $region52: #{tpu_custom_call.1} parent=47 // pred_fallthru
          _
        // Predicated region
        $region53: #{tpu_custom_call.1} parent=47 // pred_check
          %p324 = pneg %p126
        $region54: #{tpu_custom_call.1} parent=47 // pred_check_branch
          %326 = sbr.rel (%p324) target = $region56
        $region55: #{tpu_custom_call.1} parent=47 // pred_region
          %327 = dma.done [#allocation8], 2048
        $region56: #{tpu_custom_call.1} parent=47 // pred_fallthru
          _
        // Predicated region
        $region57: #{tpu_custom_call.1} parent=47 // pred_check
          %p328 = pneg %p178
        $region58: #{tpu_custom_call.1} parent=47 // pred_check_branch
          %330 = sbr.rel (%p328) target = $region60
        $region59: #{tpu_custom_call.1} parent=47 // pred_region
          %331 = dma.done [#allocation8], 2048
        $region60: #{tpu_custom_call.1} parent=47 // pred_fallthru
          _
        %s332 = sand.u32 %s45, 1
        %s333 = scalar_lea.sflag [#allocation5], %s332
        %s334 = sand.u32 %s45, 1
        %s335 = smul.addr %s334, 8
        %s336 = scalar_lea.vmem [#allocation4], %s335
        %p337 = pneg %p58
        %p338 = pneg %p55
        %p339 = pneg %p79
        %p340 = pneg %p76
        %p341 = pneg %p100
        %p342 = pneg %p97
        %p343 = pneg %p126
        %p344 = pneg %p123
        %p345 = scmp.lt.s32.totalorder %s30, 0
        %s346 = scalar_select %p345, %s30, 0
        %s347 = scalar_lea.vmem %s4, %s346
        %p348 = pneg %p152
        %p349 = pneg %p149
        %p350 = pneg %p178
        %p351 = pneg %p175
        %p352 = pneg %p199
        %p353 = pneg %p196
        %p354 = pneg %p225
        %p355 = pneg %p222
        %s356 = sand.u32 %s212, 1
        %s357 = scalar_lea.sflag [#allocation6], %s356
        %s358 = sand.u32 %s212, 1
        %s359 = smul.addr %s358, 8
        %s360 = scalar_lea.vmem [#allocation10], %s359
        %p361 = scmp.lt.s32.totalorder %s30, 0
        %s362 = scalar_select %p361, %s30, 0
        %s363 = scalar_lea.vmem %s4, %s362
        %s364 = smul.u32 16, %s30
        %p365 = scmp.eq.s32.totalorder %s30, 0
        // Predicated region
        $region61: #{tpu_custom_call.1} parent=47 // pred_check
          %p366 = pneg %p365
        $region62: #{tpu_custom_call.1} parent=47 // pred_check_branch
          %368 = sbr.rel (%p366) target = $region64
        $region63: #{tpu_custom_call.1} parent=47 // pred_region
          %v369 = vld [vmem:[%s319] sm:$0xff]
          %370 = vadd.xlane.f32.xlu0 %v369
          %v371 = vpop.xlane.xlu0 %370
          %v372 = vmul.f32 %v371, 0.03125
          %v373 = vmul.f32 %v369, %v369
          %374 = vadd.xlane.f32.xlu0 %v373
          %v375 = vpop.xlane.xlu0 %374
          %v376 = vmul.f32 %v375, 0.03125
          %v377 = vmul.f32 %v372, %v372
          %v378 = vsub.f32 %v376, %v377
          %v379 = vmax.f32 %v378, 0.0
          %v380 = vsub.f32 %v369, %v372
          %v381 = vadd.f32 %v379, 1e-05
          %v382 = vrsqrt.pop %v381
          %v383 = vmul.f32 %v380, %v382
          %v384 = vld [vmem:[%s1] sm:$0x1]
          %v386 = vlaneseq
          %v387 = vshrl.u32 %v386, 7
          %v388 = vsub.s32 0, %v387
          %v389 = vrot.slane %v384, %v388
          %v391 = vmul.f32 %v383, %v389
          %v392 = vld [vmem:[%s2] sm:$0x1]
          %v394 = vlaneseq
          %v395 = vshrl.u32 %v394, 7
          %v396 = vsub.s32 0, %v395
          %v397 = vrot.slane %v392, %v396
          %v399 = vadd.f32 %v391, %v397
          %400 = vst [vmem:[#allocation2] sm:$0xff] %v399
          %401 = vst [vmem:[#allocation3] sm:$0xff] 0.0
        $region64: #{tpu_custom_call.1} parent=47 // pred_fallthru
          _
        %v402 = vld [vmem:[#allocation2] sm:$0xff]
        %v403 = vld [vmem:[#allocation7] sm:$0xff]
        %v404 = vld [vmem:[#allocation7 + $0x8] sm:$0xff]
        %v405 = vld [vmem:[#allocation7 + $0x10] sm:$0xff]
        %v406 = vld [vmem:[#allocation7 + $0x18] sm:$0xff]
        %v407 = vld [vmem:[#allocation7 + $0x20] sm:$0xff]
        %v408 = vld [vmem:[#allocation7 + $0x28] sm:$0xff]
        %v409 = vld [vmem:[#allocation7 + $0x30] sm:$0xff]
        %v410 = vld [vmem:[#allocation7 + $0x38] sm:$0xff]
        %v411 = vld [vmem:[#allocation7 + $0x40] sm:$0xff]
        %v412 = vld [vmem:[#allocation7 + $0x48] sm:$0xff]
        %v413 = vld [vmem:[#allocation7 + $0x50] sm:$0xff]
        %v414 = vld [vmem:[#allocation7 + $0x58] sm:$0xff]
        %v415 = vld [vmem:[#allocation7 + $0x60] sm:$0xff]
        %v416 = vld [vmem:[#allocation7 + $0x68] sm:$0xff]
        %v417 = vld [vmem:[#allocation7 + $0x70] sm:$0xff]
        %v418 = vld [vmem:[#allocation7 + $0x78] sm:$0xff]
        %v419 = vld [vmem:[%s363] sm:$0x1]
        %v421 = vlaneseq
        %v422 = vshrl.u32 %v421, 7
        %v423 = vsub.s32 0, %v422
        %v424 = vrot.slane %v419, %v423
        %426 = vmatprep.subr.mxu0 0.0
        %427 = vmatpush1.msra.mxu0 %v418
        %428 = vmatprep.subr.mxu0 0.0
        %429 = vmatpush1.msra.mxu0 %v417
        %430 = vmatprep.subr.mxu0 0.0
        %431 = vmatpush1.msra.mxu0 %v416
        %432 = vmatprep.subr.mxu0 0.0
        %433 = vmatpush1.msra.mxu0 %v415
        %434 = vmatprep.subr.mxu0 0.0
        %435 = vmatpush1.msra.mxu0 %v414
        %436 = vmatprep.subr.mxu0 0.0
        %437 = vmatpush1.msra.mxu0 %v413
        %438 = vmatprep.subr.mxu0 0.0
        %439 = vmatpush1.msra.mxu0 %v412
        %440 = vmatprep.subr.mxu0 0.0
        %441 = vmatpush1.msra.mxu0 %v411
        %442 = vmatprep.subr.mxu0 0.0
        %443 = vmatpush1.msra.mxu0 %v410
        %444 = vmatprep.subr.mxu0 0.0
        %445 = vmatpush1.msra.mxu0 %v409
        %446 = vmatprep.subr.mxu0 0.0
        %447 = vmatpush1.msra.mxu0 %v408
        %448 = vmatprep.subr.mxu0 0.0
        %449 = vmatpush1.msra.mxu0 %v407
        %450 = vmatprep.subr.mxu0 0.0
        %451 = vmatpush1.msra.mxu0 %v406
        %452 = vmatprep.subr.mxu0 0.0
        %453 = vmatpush1.msra.mxu0 %v405
        %454 = vmatprep.subr.mxu0 0.0
        %455 = vmatpush1.msra.mxu0 %v404
        %456 = vmatprep.subr.mxu0 0.0
        %457 = vmatpush1.msra.mxu0 %v403
        %458 = vmatprep.subr.mxu0 0.0
        %459 = vmatpush2.msra.mxu0 0.0
        %460 = vmatprep.subr.mxu0 0.0
        %461 = vmatpush2.msra.mxu0 0.0
        %462 = vmatprep.subr.mxu0 0.0
        %463 = vmatpush2.msra.mxu0 0.0
        %464 = vmatprep.subr.mxu0 0.0
        %465 = vmatpush2.msra.mxu0 0.0
        %466 = vmatprep.subr.mxu0 0.0
        %467 = vmatpush2.msra.mxu0 0.0
        %468 = vmatprep.subr.mxu0 0.0
        %469 = vmatpush2.msra.mxu0 0.0
        %470 = vmatprep.subr.mxu0 0.0
        %471 = vmatpush2.msra.mxu0 0.0
        %472 = vmatprep.subr.mxu0 0.0
        %473 = vmatpush2.msra.mxu0 0.0
        %474 = vmatprep.subr.mxu0 0.0
        %475 = vmatpush2.msra.mxu0 0.0
        %476 = vmatprep.subr.mxu0 0.0
        %477 = vmatpush2.msra.mxu0 0.0
        %478 = vmatprep.subr.mxu0 0.0
        %479 = vmatpush2.msra.mxu0 0.0
        %480 = vmatprep.subr.mxu0 0.0
        %481 = vmatpush2.msra.mxu0 0.0
        %482 = vmatprep.subr.mxu0 0.0
        %483 = vmatpush2.msra.mxu0 0.0
        %484 = vmatprep.subr.mxu0 0.0
        %485 = vmatpush2.msra.mxu0 0.0
        %486 = vmatprep.subr.mxu0 0.0
        %487 = vmatpush2.msra.mxu0 0.0
        %488 = vmatprep.subr.mxu0 0.0
        %489 = vmatpush2.msra.mxu0 0.0
        %490 = vmatprep.mubr.f32.mxu0 0.0
        %491 = vmatmul.mubr.f32.gmra.mxu0 %v402
        %v492 = vpop.f32.mrf.mxu0
        %v493 = vadd.f32 %v424, %v492
        %v494 = vpop.f32.mrf.mxu0
        %495 = vdwg.mxu0
        %v496 = vmul.f32 %v493, 0.5
        %v497 = vmul.f32 %v493, 0.70710677
        %v498 = verf.f32.pop %v497
        %v499 = vadd.f32 %v498, 1.0
        %v500 = vmul.f32 %v496, %v499
        %v501 = vld [vmem:[#allocation3] sm:$0xff]
        %v502 = vld [vmem:[#allocation9] sm:$0xff]
        %v503 = vld [vmem:[#allocation9 + $0x8] sm:$0xff]
        %v504 = vld [vmem:[#allocation9 + $0x10] sm:$0xff]
        %v505 = vld [vmem:[#allocation9 + $0x18] sm:$0xff]
        %v506 = vld [vmem:[#allocation9 + $0x20] sm:$0xff]
        %v507 = vld [vmem:[#allocation9 + $0x28] sm:$0xff]
        %v508 = vld [vmem:[#allocation9 + $0x30] sm:$0xff]
        %v509 = vld [vmem:[#allocation9 + $0x38] sm:$0xff]
        %v510 = vld [vmem:[#allocation9 + $0x40] sm:$0xff]
        %v511 = vld [vmem:[#allocation9 + $0x48] sm:$0xff]
        %v512 = vld [vmem:[#allocation9 + $0x50] sm:$0xff]
        %v513 = vld [vmem:[#allocation9 + $0x58] sm:$0xff]
        %v514 = vld [vmem:[#allocation9 + $0x60] sm:$0xff]
        %v515 = vld [vmem:[#allocation9 + $0x68] sm:$0xff]
        %v516 = vld [vmem:[#allocation9 + $0x70] sm:$0xff]
        %v517 = vld [vmem:[#allocation9 + $0x78] sm:$0xff]
        %518 = vmatprep.subr.mxu0 0.0
        %519 = vmatpush1.msra.mxu0 %v517
        %520 = vmatprep.subr.mxu0 0.0
        %521 = vmatpush1.msra.mxu0 %v516
        %522 = vmatprep.subr.mxu0 0.0
        %523 = vmatpush1.msra.mxu0 %v515
        %524 = vmatprep.subr.mxu0 0.0
        %525 = vmatpush1.msra.mxu0 %v514
        %526 = vmatprep.subr.mxu0 0.0
        %527 = vmatpush1.msra.mxu0 %v513
        %528 = vmatprep.subr.mxu0 0.0
        %529 = vmatpush1.msra.mxu0 %v512
        %530 = vmatprep.subr.mxu0 0.0
        %531 = vmatpush1.msra.mxu0 %v511
        %532 = vmatprep.subr.mxu0 0.0
        %533 = vmatpush1.msra.mxu0 %v510
        %534 = vmatprep.subr.mxu0 0.0
        %535 = vmatpush1.msra.mxu0 %v509
        %536 = vmatprep.subr.mxu0 0.0
        %537 = vmatpush1.msra.mxu0 %v508
        %538 = vmatprep.subr.mxu0 0.0
        %539 = vmatpush1.msra.mxu0 %v507
        %540 = vmatprep.subr.mxu0 0.0
        %541 = vmatpush1.msra.mxu0 %v506
        %542 = vmatprep.subr.mxu0 0.0
        %543 = vmatpush1.msra.mxu0 %v505
        %544 = vmatprep.subr.mxu0 0.0
        %545 = vmatpush1.msra.mxu0 %v504
        %546 = vmatprep.subr.mxu0 0.0
        %547 = vmatpush1.msra.mxu0 %v503
        %548 = vmatprep.subr.mxu0 0.0
        %549 = vmatpush1.msra.mxu0 %v502
        %550 = vmatprep.subr.mxu0 0.0
        %551 = vmatpush2.msra.mxu0 0.0
        %552 = vmatprep.subr.mxu0 0.0
        %553 = vmatpush2.msra.mxu0 0.0
        %554 = vmatprep.subr.mxu0 0.0
        %555 = vmatpush2.msra.mxu0 0.0
        %556 = vmatprep.subr.mxu0 0.0
        %557 = vmatpush2.msra.mxu0 0.0
        %558 = vmatprep.subr.mxu0 0.0
        %559 = vmatpush2.msra.mxu0 0.0
        %560 = vmatprep.subr.mxu0 0.0
        %561 = vmatpush2.msra.mxu0 0.0
        %562 = vmatprep.subr.mxu0 0.0
        %563 = vmatpush2.msra.mxu0 0.0
        %564 = vmatprep.subr.mxu0 0.0
        %565 = vmatpush2.msra.mxu0 0.0
        %566 = vmatprep.subr.mxu0 0.0
        %567 = vmatpush2.msra.mxu0 0.0
        %568 = vmatprep.subr.mxu0 0.0
        %569 = vmatpush2.msra.mxu0 0.0
        %570 = vmatprep.subr.mxu0 0.0
        %571 = vmatpush2.msra.mxu0 0.0
        %572 = vmatprep.subr.mxu0 0.0
        %573 = vmatpush2.msra.mxu0 0.0
        %574 = vmatprep.subr.mxu0 0.0
        %575 = vmatpush2.msra.mxu0 0.0
        %576 = vmatprep.subr.mxu0 0.0
        %577 = vmatpush2.msra.mxu0 0.0
        %578 = vmatprep.subr.mxu0 0.0
        %579 = vmatpush2.msra.mxu0 0.0
        %580 = vmatprep.subr.mxu0 0.0
        %581 = vmatpush2.msra.mxu0 0.0
        %582 = vmatprep.mubr.f32.mxu0 0.0
        %583 = vmatmul.mubr.f32.gmra.mxu0 %v500
        %v584 = vpop.f32.mrf.mxu0
        %v585 = vadd.f32 0.0, %v584
        %v586 = vpop.f32.mrf.mxu0
        %587 = vdwg.mxu0
        %v588 = vadd.f32 %v501, %v585
        %589 = vst [vmem:[#allocation3] sm:$0xff] %v588
        // Predicated region
        $region65: #{tpu_custom_call.1} parent=47 // pred_check
          %p590 = pneg %p365
        $region66: #{tpu_custom_call.1} parent=47 // pred_check_branch
          %592 = sbr.rel (%p590) target = $region68
        $region67: #{tpu_custom_call.1} parent=47 // pred_region
          %v593 = vld [vmem:[#allocation3] sm:$0xff]
          %v594 = vld [vmem:[%s6] sm:$0x1]
          %v596 = vlaneseq
          %v597 = vshrl.u32 %v596, 7
          %v598 = vsub.s32 0, %v597
          %v599 = vrot.slane %v594, %v598
          %v601 = vadd.f32 %v593, %v599
          %v602 = vld [vmem:[#allocation2] sm:$0xff]
          %v603 = vadd.f32 %v602, %v601
          %604 = vst [vmem:[%s360] sm:$0xff] %v603
        $region68: #{tpu_custom_call.1} parent=47 // pred_fallthru
          _
        %s605 = sand.u32 %s212, 1
        %s606 = scalar_lea.sflag [#allocation6], %s605
        %s607 = sand.u32 %s212, 1
        %s608 = smul.addr %s607, 8
        %s609 = scalar_lea.vmem [#allocation10], %s608
        // Predicated region
        $region69: #{tpu_custom_call.1} parent=47 // pred_check
          %p610 = pneg %p222
        $region70: #{tpu_custom_call.1} parent=47 // pred_check_branch
          %612 = sbr.rel (%p610) target = $region72
        $region71: #{tpu_custom_call.1} parent=47 // pred_region
          %s614 = ssub.s32 128, 128
          %615 = vsyncadd %s606, %s614
          %s616 = smul.addr %s29, 128
          %s617 = scalar_lea.hbm %s7, %s616
          %s619 = sshll.u32 %s609, 4
          %s620 = int_to_ptr.vmem [resolvable:$true] %s619
          %622 = dma.vmem_to_hbm [thread:$0]  %s620, 128, %s617, %s606
        $region72: #{tpu_custom_call.1} parent=47 // pred_fallthru
          _
      $region48: #{tpu_custom_call.1} parent=5 // pred_fallthru
        _
      %p623 = scmp.le.s32.totalorder 2, %s20
      // Predicated region
      $region73: #{tpu_custom_call.1} parent=5 // pred_check
        %p624 = pneg %p623
      $region74: #{tpu_custom_call.1} parent=5 // pred_check_branch
        %626 = sbr.rel (%p624) target = $region76
      $region75: #{tpu_custom_call.1} parent=5 // pred_region
        %s627 = ssub.s32 %s20, 2
        // Predicated region
        $region77: #{tpu_custom_call.1} parent=75 // pred_check
          %p628 = pneg %p228
        $region78: #{tpu_custom_call.1} parent=75 // pred_check_branch
          %630 = sbr.rel (%p628) target = $region80
        $region79: #{tpu_custom_call.1} parent=75 // pred_region
          %s631 = sand.u32 %s213, 1
          %s632 = scalar_lea.sflag [#allocation6], %s631
          %s633 = sand.u32 %s213, 1
          %s634 = smul.addr %s633, 8
          %s635 = scalar_lea.vmem [#allocation10], %s634
          %636 = dma.done %s632, 128
        $region80: #{tpu_custom_call.1} parent=75 // pred_fallthru
          _
      $region76: #{tpu_custom_call.1} parent=5 // pred_fallthru
        _
    $region6: #{tpu_custom_call.1} parent=1 // loop_footer
      %s24 = sadd.s32 1, %s20
    $region7: #{tpu_custom_call.1} parent=1 // loop_footer_branch
      %19 = sbr.rel target = $region3
    $region8: #{tpu_custom_call.1} parent=1 // loop_exit
      _
    %637 = vsyncpa [#allocation5], 1
    %s638 = scalar_lea.sflag [#allocation5], 1
    %639 = vsyncpa %s638, 1
    %640 = vsyncpa [#allocation8], 1
    %641 = vsyncpa [#allocation6], 1
    %s642 = scalar_lea.sflag [#allocation6], 1
    %643 = vsyncpa %s642, 1

// kernel: tpu_custom_call.1
$region0: #{tpu_custom_call.1}
  #allocation0 [shape = 'u32[]', space=smem, size = 0x4, offset = 0x4, fixed_abs, tag = 'smem constant byte address 0x4 - core index']
  #allocation1 [shape = 'u32[144,128]{1,0:T(1,128)}', space=vmem, size = 0x12000, scoped, tag = 'internal scratch']
  #allocation2 [shape = 'f32[8,128]{1,0:T(8,128)}', space=vmem, size = 0x1000, scoped, tag = 'scratch operand']
  #allocation3 [shape = 'f32[8,128]{1,0:T(8,128)}', space=vmem, size = 0x1000, scoped, tag = 'scratch operand']
  %s0 = inlined_call_operand.hbm [shape: f32[16,128], index: 0, kind: input, shape index: {}]
  %s1 = inlined_call_operand.vmem [shape: f32[1,128], index: 1, kind: input, shape index: {}]
  %s2 = inlined_call_operand.vmem [shape: f32[1,128], index: 2, kind: input, shape index: {}]
  %s3 = inlined_call_operand.hbm [shape: f32[128,128], index: 3, kind: input, shape index: {}]
  %s4 = inlined_call_operand.vmem [shape: f32[1,128], index: 4, kind: input, shape index: {}]
  %s5 = inlined_call_operand.hbm [shape: f32[128,128], index: 5, kind: input, shape index: {}]
  %s6 = inlined_call_operand.vmem [shape: f32[1,128], index: 6, kind: input, shape index: {}]
  %s7 = inlined_call_operand.hbm [shape: f32[16,128], index: 7, kind: output, shape index: {}]
  %s8 = sld [smem:[#allocation0]]
  $region81: #{tpu_custom_call.1} parent=0
    _
  %s10 = ssub.s32 1, %s8
  %s11 = scalar_select 0, %s10, %s8
  $region1: #{tpu_custom_call.1} parent=0
    #allocation4 [shape = 'u8[8192]{0}', space=vmem, size = 0x2000, scoped, tag = 'input window, operand 0']
    #allocation5 [shape = 's32[2]{0}', space=sflag, size = 0x8, scoped, tag = 'scoped memory for tpu_custom_call.1']
    #allocation6 [shape = 's32[2]{0}', space=sflag, size = 0x8, scoped, tag = 'scoped memory for tpu_custom_call.1']
    #allocation7 [shape = 'u8[65536]{0}', space=vmem, size = 0x10000, scoped, tag = 'input window, operand 3, single buffered']
    #allocation8 [shape = 's32[1]{0}', space=sflag, size = 0x4, scoped, tag = 'scoped memory for tpu_custom_call.1']
    #allocation9 [shape = 'u8[65536]{0}', space=vmem, size = 0x10000, scoped, tag = 'input window, operand 5, single buffered']
    #allocation10 [shape = 'u8[8192]{0}', space=vmem, size = 0x2000, scoped, tag = 'output window, operand 0']
    %12 = vsyncpa [#allocation5], 0
    %s13 = scalar_lea.sflag [#allocation5], 1
    %14 = vsyncpa %s13, 0
    %15 = vsyncpa [#allocation8], 0
    %16 = vsyncpa [#allocation6], 0
    %s17 = scalar_lea.sflag [#allocation6], 1
    %18 = vsyncpa %s17, 0
    loop: start=0, step=1, limit=4
    $region2: #{tpu_custom_call.1} parent=1 // loop_pre_header
      _
    $region3: #{tpu_custom_call.1} parent=1 // loop_header
      %s20 = sphi 0, %s24
      %p21 = scmp.ge.s32.totalorder %s20, 4
      %s27 = sphi 0, %s39
      %s28 = sphi 0, %s35
      %s29 = sphi 0, %s27
      %s30 = sphi 0, %s28
      %s31 = sphi 0, %s29
      %s32 = sphi 0, %s30
      %s42 = sphi 0, %s44
      %s45 = sphi 0, %s42
      %s46 = sphi 0, %s45
      %s62 = sphi 0, %s46
      %s66 = sphi 0, %s66
      %s68 = sphi 0, %s66
      %s69 = sphi 0, %s68
      %s83 = sphi 0, %s69
      %s87 = sphi 0, %s87
      %s89 = sphi 0, %s87
      %s90 = sphi 0, %s89
      %s104 = sphi 0, %s90
      %s110 = sphi 0, %s112
      %s113 = sphi 0, %s110
      %s114 = sphi 0, %s113
      %s130 = sphi 0, %s114
      %s136 = sphi 0, %s138
      %s139 = sphi 0, %s136
      %s140 = sphi 0, %s139
      %s156 = sphi 0, %s140
      %s162 = sphi 0, %s164
      %s165 = sphi 0, %s162
      %s166 = sphi 0, %s165
      %s182 = sphi 0, %s166
      %s186 = sphi 0, %s186
      %s188 = sphi 0, %s186
      %s189 = sphi 0, %s188
      %s203 = sphi 0, %s189
      %s209 = sphi 0, %s211
      %s212 = sphi 0, %s209
      %s213 = sphi 0, %s212
      %s229 = sphi 0, %s213
    $region4: #{tpu_custom_call.1} parent=1 // loop_header_branch
      %23 = sbr.rel (%p21) target = $region8
    $region5: #{tpu_custom_call.1} parent=1 // loop_body
      %s25 = ssub.s32 %s20, 1
      %s26 = ssub.s32 %s20, 2
      %s33 = sadd.s32 1, %s28
      %p34 = scmp.ge.s32.totalorder %s33, 1
      %s35 = scalar_select %p34, 0, %s33
      %s36 = sadd.s32 1, %s27
      %s37 = scalar_select %p34, %s36, %s27
      %p38 = scmp.ge.s32.totalorder %s37, 2
      %s39 = scalar_select %p38, 0, %s37
      %s40 = ssub.s32 %s27, %s39
      %p41 = scmp.eq.s32.totalorder %s40, 0
      %s43 = sadd.s32 %s42, 1
      %s44 = scalar_select %p41, %s42, %s43
      %p47 = pneg %p41
      %p48 = scmp.eq.s32.totalorder %s20, 1
      %p49 = por %p47, %p48
      %p50 = scmp.ne.s32.totalorder %s42, %s45
      %p51 = scmp.eq.s32.totalorder %s20, 0
      %p52 = por %p50, %p51
      %p53 = scmp.ne.s32.totalorder %s42, %s45
      %p54 = scmp.eq.s32.totalorder %s25, 1
      %p55 = por %p53, %p54
      %p56 = scmp.ne.s32.totalorder %s45, %s46
      %p57 = scmp.eq.s32.totalorder %s25, 0
      %p58 = por %p56, %p57
      %p59 = scmp.ne.s32.totalorder %s45, %s46
      %p60 = scmp.eq.s32.totalorder %s26, 1
      %p61 = por %p59, %p60
      %p63 = scmp.ne.s32.totalorder %s46, %s62
      %p64 = scmp.eq.s32.totalorder %s26, 0
      %p65 = por %p63, %p64
      %s67 = sadd.s32 %s66, 1
      %p70 = scmp.eq.s32.totalorder %s20, 1
      %p71 = scmp.ne.s32.totalorder %s66, %s68
      %p72 = scmp.eq.s32.totalorder %s20, 0
      %p73 = por %p71, %p72
      %p74 = scmp.ne.s32.totalorder %s66, %s68
      %p75 = scmp.eq.s32.totalorder %s25, 1
      %p76 = por %p74, %p75
      %p77 = scmp.ne.s32.totalorder %s68, %s69
      %p78 = scmp.eq.s32.totalorder %s25, 0
      %p79 = por %p77, %p78
      %p80 = scmp.ne.s32.totalorder %s68, %s69
      %p81 = scmp.eq.s32.totalorder %s26, 1
      %p82 = por %p80, %p81
      %p84 = scmp.ne.s32.totalorder %s69, %s83
      %p85 = scmp.eq.s32.totalorder %s26, 0
      %p86 = por %p84, %p85
      %s88 = sadd.s32 %s87, 1
      %p91 = scmp.eq.s32.totalorder %s20, 1
      %p92 = scmp.ne.s32.totalorder %s87, %s89
      %p93 = scmp.eq.s32.totalorder %s20, 0
      %p94 = por %p92, %p93
      %p95 = scmp.ne.s32.totalorder %s87, %s89
      %p96 = scmp.eq.s32.totalorder %s25, 1
      %p97 = por %p95, %p96
      %p98 = scmp.ne.s32.totalorder %s89, %s90
      %p99 = scmp.eq.s32.totalorder %s25, 0
      %p100 = por %p98, %p99
      %p101 = scmp.ne.s32.totalorder %s89, %s90
      %p102 = scmp.eq.s32.totalorder %s26, 1
      %p103 = por %p101, %p102
      %p105 = scmp.ne.s32.totalorder %s90, %s104
      %p106 = scmp.eq.s32.totalorder %s26, 0
      %p107 = por %p105, %p106
      %s108 = ssub.s32 %s28, %s35
      %p109 = scmp.eq.s32.totalorder %s108, 0
      %s111 = sadd.s32 %s110, 1
      %s112 = scalar_select %p109, %s110, %s111
      %p115 = pneg %p109
      %p116 = scmp.eq.s32.totalorder %s20, 1
      %p117 = por %p115, %p116
      %p118 = scmp.ne.s32.totalorder %s110, %s113
      %p119 = scmp.eq.s32.totalorder %s20, 0
      %p120 = por %p118, %p119
      %p121 = scmp.ne.s32.totalorder %s110, %s113
      %p122 = scmp.eq.s32.totalorder %s25, 1
      %p123 = por %p121, %p122
      %p124 = scmp.ne.s32.totalorder %s113, %s114
      %p125 = scmp.eq.s32.totalorder %s25, 0
      %p126 = por %p124, %p125
      %p127 = scmp.ne.s32.totalorder %s113, %s114
      %p128 = scmp.eq.s32.totalorder %s26, 1
      %p129 = por %p127, %p128
      %p131 = scmp.ne.s32.totalorder %s114, %s130
      %p132 = scmp.eq.s32.totalorder %s26, 0
      %p133 = por %p131, %p132
      %s134 = ssub.s32 %s28, %s35
      %p135 = scmp.eq.s32.totalorder %s134, 0
      %s137 = sadd.s32 %s136, 1
      %s138 = scalar_select %p135, %s136, %s137
      %p141 = pneg %p135
      %p142 = scmp.eq.s32.totalorder %s20, 1
      %p143 = por %p141, %p142
      %p144 = scmp.ne.s32.totalorder %s136, %s139
      %p145 = scmp.eq.s32.totalorder %s20, 0
      %p146 = por %p144, %p145
      %p147 = scmp.ne.s32.totalorder %s136, %s139
      %p148 = scmp.eq.s32.totalorder %s25, 1
      %p149 = por %p147, %p148
      %p150 = scmp.ne.s32.totalorder %s139, %s140
      %p151 = scmp.eq.s32.totalorder %s25, 0
      %p152 = por %p150, %p151
      %p153 = scmp.ne.s32.totalorder %s139, %s140
      %p154 = scmp.eq.s32.totalorder %s26, 1
      %p155 = por %p153, %p154
      %p157 = scmp.ne.s32.totalorder %s140, %s156
      %p158 = scmp.eq.s32.totalorder %s26, 0
      %p159 = por %p157, %p158
      %s160 = ssub.s32 %s28, %s35
      %p161 = scmp.eq.s32.totalorder %s160, 0
      %s163 = sadd.s32 %s162, 1
      %s164 = scalar_select %p161, %s162, %s163
      %p167 = pneg %p161
      %p168 = scmp.eq.s32.totalorder %s20, 1
      %p169 = por %p167, %p168
      %p170 = scmp.ne.s32.totalorder %s162, %s165
      %p171 = scmp.eq.s32.totalorder %s20, 0
      %p172 = por %p170, %p171
      %p173 = scmp.ne.s32.totalorder %s162, %s165
      %p174 = scmp.eq.s32.totalorder %s25, 1
      %p175 = por %p173, %p174
      %p176 = scmp.ne.s32.totalorder %s165, %s166
      %p177 = scmp.eq.s32.totalorder %s25, 0
      %p178 = por %p176, %p177
      %p179 = scmp.ne.s32.totalorder %s165, %s166
      %p180 = scmp.eq.s32.totalorder %s26, 1
      %p181 = por %p179, %p180
      %p183 = scmp.ne.s32.totalorder %s166, %s182
      %p184 = scmp.eq.s32.totalorder %s26, 0
      %p185 = por %p183, %p184
      %s187 = sadd.s32 %s186, 1
      %p190 = scmp.eq.s32.totalorder %s20, 1
      %p191 = scmp.ne.s32.totalorder %s186, %s188
      %p192 = scmp.eq.s32.totalorder %s20, 0
      %p193 = por %p191, %p192
      %p194 = scmp.ne.s32.totalorder %s186, %s188
      %p195 = scmp.eq.s32.totalorder %s25, 1
      %p196 = por %p194, %p195
      %p197 = scmp.ne.s32.totalorder %s188, %s189
      %p198 = scmp.eq.s32.totalorder %s25, 0
      %p199 = por %p197, %p198
      %p200 = scmp.ne.s32.totalorder %s188, %s189
      %p201 = scmp.eq.s32.totalorder %s26, 1
      %p202 = por %p200, %p201
      %p204 = scmp.ne.s32.totalorder %s189, %s203
      %p205 = scmp.eq.s32.totalorder %s26, 0
      %p206 = por %p204, %p205
      %s207 = ssub.s32 %s27, %s39
      %p208 = scmp.eq.s32.totalorder %s207, 0
      %s210 = sadd.s32 %s209, 1
      %s211 = scalar_select %p208, %s209, %s210
      %p214 = pneg %p208
      %p215 = scmp.eq.s32.totalorder %s20, 1
      %p216 = por %p214, %p215
      %p217 = scmp.ne.s32.totalorder %s209, %s212
      %p218 = scmp.eq.s32.totalorder %s20, 0
      %p219 = por %p217, %p218
      %p220 = scmp.ne.s32.totalorder %s209, %s212
      %p221 = scmp.eq.s32.totalorder %s25, 1
      %p222 = por %p220, %p221
      %p223 = scmp.ne.s32.totalorder %s212, %s213
      %p224 = scmp.eq.s32.totalorder %s25, 0
      %p225 = por %p223, %p224
      %p226 = scmp.ne.s32.totalorder %s212, %s213
      %p227 = scmp.eq.s32.totalorder %s26, 1
      %p228 = por %p226, %p227
      %p230 = scmp.ne.s32.totalorder %s213, %s229
      %p231 = scmp.eq.s32.totalorder %s26, 0
      %p232 = por %p230, %p231
      %p233 = scmp.le.s32.totalorder 1, %s20
      %p234 = scmp.lt.s32.totalorder %s20, 3
      %p235 = pnand %p233, %p234
      %p236 = pneg %p235
      // Predicated region
      $region9: #{tpu_custom_call.1} parent=5 // pred_check
        _
      $region10: #{tpu_custom_call.1} parent=5 // pred_check_branch
        %238 = sbr.rel (%p235) target = $region12
      $region11: #{tpu_custom_call.1} parent=5 // pred_region
        %s239 = ssub.s32 %s20, 1
        // Predicated region
        $region13: #{tpu_custom_call.1} parent=11 // pred_check
          %p240 = pneg %p79
        $region14: #{tpu_custom_call.1} parent=11 // pred_check_branch
          %242 = sbr.rel (%p240) target = $region16
        $region15: #{tpu_custom_call.1} parent=11 // pred_region
          _
        $region16: #{tpu_custom_call.1} parent=11 // pred_fallthru
          _
        // Predicated region
        $region17: #{tpu_custom_call.1} parent=11 // pred_check
          %p243 = pneg %p100
        $region18: #{tpu_custom_call.1} parent=11 // pred_check_branch
          %245 = sbr.rel (%p243) target = $region20
        $region19: #{tpu_custom_call.1} parent=11 // pred_region
          _
        $region20: #{tpu_custom_call.1} parent=11 // pred_fallthru
          _
        // Predicated region
        $region21: #{tpu_custom_call.1} parent=11 // pred_check
          %p246 = pneg %p126
        $region22: #{tpu_custom_call.1} parent=11 // pred_check_branch
          %248 = sbr.rel (%p246) target = $region24
        $region23: #{tpu_custom_call.1} parent=11 // pred_region
          %s250 = ssub.s32 2048, 2048
          %251 = vsyncadd [#allocation8], %s250
          %s252 = smul.addr %s30, 128
          %s253 = scalar_lea.hbm %s3, %s252
          %s254 = sshll.u32 [#allocation7], 4
          %s255 = int_to_ptr.vmem [resolvable:$true] %s254
          %260 = dma.hbm_to_vmem [thread:$0]  %s253, 2048, %s255, [#allocation8], 128, 128, 8
        $region24: #{tpu_custom_call.1} parent=11 // pred_fallthru
          _
        // Predicated region
        $region25: #{tpu_custom_call.1} parent=11 // pred_check
          %p261 = pneg %p152
        $region26: #{tpu_custom_call.1} parent=11 // pred_check_branch
          %263 = sbr.rel (%p261) target = $region28
        $region27: #{tpu_custom_call.1} parent=11 // pred_region
          %p264 = scmp.lt.s32.totalorder %s30, 0
          %s265 = scalar_select %p264, %s30, 0
          %s266 = scalar_lea.vmem %s4, %s265
        $region28: #{tpu_custom_call.1} parent=11 // pred_fallthru
          _
        // Predicated region
        $region29: #{tpu_custom_call.1} parent=11 // pred_check
          %p267 = pneg %p178
        $region30: #{tpu_custom_call.1} parent=11 // pred_check_branch
          %269 = sbr.rel (%p267) target = $region32
        $region31: #{tpu_custom_call.1} parent=11 // pred_region
          %s270 = smul.u32 16, %s30
          %s272 = ssub.s32 2048, 2048
          %273 = vsyncadd [#allocation8], %s272
          %s274 = smul.addr %s270, 128
          %s275 = scalar_lea.hbm %s5, %s274
          %s276 = sshll.u32 [#allocation9], 4
          %s277 = int_to_ptr.vmem [resolvable:$true] %s276
          %282 = dma.hbm_to_vmem [thread:$0]  %s275, 2048, %s277, [#allocation8], 128, 128, 8
        $region32: #{tpu_custom_call.1} parent=11 // pred_fallthru
          _
        // Predicated region
        $region33: #{tpu_custom_call.1} parent=11 // pred_check
          %p283 = pneg %p199
        $region34: #{tpu_custom_call.1} parent=11 // pred_check_branch
          %285 = sbr.rel (%p283) target = $region36
        $region35: #{tpu_custom_call.1} parent=11 // pred_region
          _
        $region36: #{tpu_custom_call.1} parent=11 // pred_fallthru
          _
      $region12: #{tpu_custom_call.1} parent=5 // pred_fallthru
        _
      %p286 = scmp.lt.s32.totalorder %s20, 2
      // Predicated region
      $region37: #{tpu_custom_call.1} parent=5 // pred_check
        %p287 = pneg %p286
      $region38: #{tpu_custom_call.1} parent=5 // pred_check_branch
        %289 = sbr.rel (%p287) target = $region40
      $region39: #{tpu_custom_call.1} parent=5 // pred_region
        // Predicated region
        $region41: #{tpu_custom_call.1} parent=39 // pred_check
          %p290 = pneg %p52
        $region42: #{tpu_custom_call.1} parent=39 // pred_check_branch
          %292 = sbr.rel (%p290) target = $region44
        $region43: #{tpu_custom_call.1} parent=39 // pred_region
          %s293 = sand.u32 %s42, 1
          %s294 = scalar_lea.sflag [#allocation5], %s293
          %s295 = sand.u32 %s42, 1
          %s296 = smul.addr %s295, 8
          %s297 = scalar_lea.vmem [#allocation4], %s296
          %s299 = ssub.s32 128, 128
          %300 = vsyncadd %s294, %s299
          %s301 = smul.addr %s27, 128
          %s302 = scalar_lea.hbm %s0, %s301
          %s304 = sshll.u32 %s297, 4
          %s305 = int_to_ptr.vmem [resolvable:$true] %s304
          %307 = dma.hbm_to_vmem [thread:$0]  %s302, 128, %s305, %s294
        $region44: #{tpu_custom_call.1} parent=39 // pred_fallthru
          _
      $region40: #{tpu_custom_call.1} parent=5 // pred_fallthru
        _
      %p308 = scmp.le.s32.totalorder 1, %s20
      %p309 = scmp.lt.s32.totalorder %s20, 3
      %p310 = pnand %p308, %p309
      %p311 = pneg %p310
      // Predicated region
      $region45: #{tpu_custom_call.1} parent=5 // pred_check
        _
      $region46: #{tpu_custom_call.1} parent=5 // pred_check_branch
        %313 = sbr.rel (%p310) target = $region48
      $region47: #{tpu_custom_call.1} parent=5 // pred_region
        %s314 = ssub.s32 %s20, 1
        %s315 = sand.u32 %s45, 1
        %s316 = scalar_lea.sflag [#allocation5], %s315
        %s317 = sand.u32 %s45, 1
        %s318 = smul.addr %s317, 8
        %s319 = scalar_lea.vmem [#allocation4], %s318
        // Predicated region
        $region49: #{tpu_custom_call.1} parent=47 // pred_check
          %p320 = pneg %p58
        $region50: #{tpu_custom_call.1} parent=47 // pred_check_branch
          %322 = sbr.rel (%p320) target = $region52
        $region51: #{tpu_custom_call.1} parent=47 // pred_region
          %323 = dma.done %s316, 128
        $region52: #{tpu_custom_call.1} parent=47 // pred_fallthru
          _
        // Predicated region
        $region53: #{tpu_custom_call.1} parent=47 // pred_check
          %p324 = pneg %p126
        $region54: #{tpu_custom_call.1} parent=47 // pred_check_branch
          %326 = sbr.rel (%p324) target = $region56
        $region55: #{tpu_custom_call.1} parent=47 // pred_region
          %327 = dma.done [#allocation8], 2048
        $region56: #{tpu_custom_call.1} parent=47 // pred_fallthru
          _
        // Predicated region
        $region57: #{tpu_custom_call.1} parent=47 // pred_check
          %p328 = pneg %p178
        $region58: #{tpu_custom_call.1} parent=47 // pred_check_branch
          %330 = sbr.rel (%p328) target = $region60
        $region59: #{tpu_custom_call.1} parent=47 // pred_region
          %331 = dma.done [#allocation8], 2048
        $region60: #{tpu_custom_call.1} parent=47 // pred_fallthru
          _
        %s332 = sand.u32 %s45, 1
        %s333 = scalar_lea.sflag [#allocation5], %s332
        %s334 = sand.u32 %s45, 1
        %s335 = smul.addr %s334, 8
        %s336 = scalar_lea.vmem [#allocation4], %s335
        %p337 = pneg %p58
        %p338 = pneg %p55
        %p339 = pneg %p79
        %p340 = pneg %p76
        %p341 = pneg %p100
        %p342 = pneg %p97
        %p343 = pneg %p126
        %p344 = pneg %p123
        %p345 = scmp.lt.s32.totalorder %s30, 0
        %s346 = scalar_select %p345, %s30, 0
        %s347 = scalar_lea.vmem %s4, %s346
        %p348 = pneg %p152
        %p349 = pneg %p149
        %p350 = pneg %p178
        %p351 = pneg %p175
        %p352 = pneg %p199
        %p353 = pneg %p196
        %p354 = pneg %p225
        %p355 = pneg %p222
        %s356 = sand.u32 %s212, 1
        %s357 = scalar_lea.sflag [#allocation6], %s356
        %s358 = sand.u32 %s212, 1
        %s359 = smul.addr %s358, 8
        %s360 = scalar_lea.vmem [#allocation10], %s359
        %p361 = scmp.lt.s32.totalorder %s30, 0
        %s362 = scalar_select %p361, %s30, 0
        %s363 = scalar_lea.vmem %s4, %s362
        %s364 = smul.u32 16, %s30
        %p365 = scmp.eq.s32.totalorder %s30, 0
        // Predicated region
        $region61: #{tpu_custom_call.1} parent=47 // pred_check
          %p366 = pneg %p365
        $region62: #{tpu_custom_call.1} parent=47 // pred_check_branch
          %368 = sbr.rel (%p366) target = $region64
        $region63: #{tpu_custom_call.1} parent=47 // pred_region
          %v369 = vld [vmem:[%s319] sm:$0xff]
          %370 = vadd.xlane.f32.xlu0 %v369
          %v371 = vpop.xlane.xlu0 %370
          %v372 = vmul.f32 %v371, 0.03125
          %v373 = vmul.f32 %v369, %v369
          %374 = vadd.xlane.f32.xlu0 %v373
          %v375 = vpop.xlane.xlu0 %374
          %v376 = vmul.f32 %v375, 0.03125
          %v377 = vmul.f32 %v372, %v372
          %v378 = vsub.f32 %v376, %v377
          %v379 = vmax.f32 %v378, 0.0
          %v380 = vsub.f32 %v369, %v372
          %v381 = vadd.f32 %v379, 1e-05
          %v382 = vrsqrt.pop %v381
          %v383 = vmul.f32 %v380, %v382
          %v384 = vld [vmem:[%s1] sm:$0x1]
          %v386 = vlaneseq
          %v387 = vshrl.u32 %v386, 7
          %v388 = vsub.s32 0, %v387
          %v389 = vrot.slane %v384, %v388
          %v391 = vmul.f32 %v383, %v389
          %v392 = vld [vmem:[%s2] sm:$0x1]
          %v394 = vlaneseq
          %v395 = vshrl.u32 %v394, 7
          %v396 = vsub.s32 0, %v395
          %v397 = vrot.slane %v392, %v396
          %v399 = vadd.f32 %v391, %v397
          %400 = vst [vmem:[#allocation2] sm:$0xff] %v399
          %401 = vst [vmem:[#allocation3] sm:$0xff] 0.0
        $region64: #{tpu_custom_call.1} parent=47 // pred_fallthru
          _
        %v402 = vld [vmem:[#allocation2] sm:$0xff]
        %v403 = vld [vmem:[#allocation7] sm:$0xff]
        %v404 = vld [vmem:[#allocation7 + $0x8] sm:$0xff]
        %v405 = vld [vmem:[#allocation7 + $0x10] sm:$0xff]
        %v406 = vld [vmem:[#allocation7 + $0x18] sm:$0xff]
        %v407 = vld [vmem:[#allocation7 + $0x20] sm:$0xff]
        %v408 = vld [vmem:[#allocation7 + $0x28] sm:$0xff]
        %v409 = vld [vmem:[#allocation7 + $0x30] sm:$0xff]
        %v410 = vld [vmem:[#allocation7 + $0x38] sm:$0xff]
        %v411 = vld [vmem:[#allocation7 + $0x40] sm:$0xff]
        %v412 = vld [vmem:[#allocation7 + $0x48] sm:$0xff]
        %v413 = vld [vmem:[#allocation7 + $0x50] sm:$0xff]
        %v414 = vld [vmem:[#allocation7 + $0x58] sm:$0xff]
        %v415 = vld [vmem:[#allocation7 + $0x60] sm:$0xff]
        %v416 = vld [vmem:[#allocation7 + $0x68] sm:$0xff]
        %v417 = vld [vmem:[#allocation7 + $0x70] sm:$0xff]
        %v418 = vld [vmem:[#allocation7 + $0x78] sm:$0xff]
        %v419 = vld [vmem:[%s363] sm:$0x1]
        %v421 = vlaneseq
        %v422 = vshrl.u32 %v421, 7
        %v423 = vsub.s32 0, %v422
        %v424 = vrot.slane %v419, %v423
        %426 = vmatprep.subr.mxu0 0.0
        %427 = vmatpush1.msra.mxu0 %v418
        %428 = vmatprep.subr.mxu0 0.0
        %429 = vmatpush1.msra.mxu0 %v417
        %430 = vmatprep.subr.mxu0 0.0
        %431 = vmatpush1.msra.mxu0 %v416
        %432 = vmatprep.subr.mxu0 0.0
        %433 = vmatpush1.msra.mxu0 %v415
        %434 = vmatprep.subr.mxu0 0.0
        %435 = vmatpush1.msra.mxu0 %v414
        %436 = vmatprep.subr.mxu0 0.0
        %437 = vmatpush1.msra.mxu0 %v413
        %438 = vmatprep.subr.mxu0 0.0
        %439 = vmatpush1.msra.mxu0 %v412
        %440 = vmatprep.subr.mxu0 0.0
        %441 = vmatpush1.msra.mxu0 %v411
        %442 = vmatprep.subr.mxu0 0.0
        %443 = vmatpush1.msra.mxu0 %v410
        %444 = vmatprep.subr.mxu0 0.0
        %445 = vmatpush1.msra.mxu0 %v409
        %446 = vmatprep.subr.mxu0 0.0
        %447 = vmatpush1.msra.mxu0 %v408
        %448 = vmatprep.subr.mxu0 0.0
        %449 = vmatpush1.msra.mxu0 %v407
        %450 = vmatprep.subr.mxu0 0.0
        %451 = vmatpush1.msra.mxu0 %v406
        %452 = vmatprep.subr.mxu0 0.0
        %453 = vmatpush1.msra.mxu0 %v405
        %454 = vmatprep.subr.mxu0 0.0
        %455 = vmatpush1.msra.mxu0 %v404
        %456 = vmatprep.subr.mxu0 0.0
        %457 = vmatpush1.msra.mxu0 %v403
        %458 = vmatprep.subr.mxu0 0.0
        %459 = vmatpush2.msra.mxu0 0.0
        %460 = vmatprep.subr.mxu0 0.0
        %461 = vmatpush2.msra.mxu0 0.0
        %462 = vmatprep.subr.mxu0 0.0
        %463 = vmatpush2.msra.mxu0 0.0
        %464 = vmatprep.subr.mxu0 0.0
        %465 = vmatpush2.msra.mxu0 0.0
        %466 = vmatprep.subr.mxu0 0.0
        %467 = vmatpush2.msra.mxu0 0.0
        %468 = vmatprep.subr.mxu0 0.0
        %469 = vmatpush2.msra.mxu0 0.0
        %470 = vmatprep.subr.mxu0 0.0
        %471 = vmatpush2.msra.mxu0 0.0
        %472 = vmatprep.subr.mxu0 0.0
        %473 = vmatpush2.msra.mxu0 0.0
        %474 = vmatprep.subr.mxu0 0.0
        %475 = vmatpush2.msra.mxu0 0.0
        %476 = vmatprep.subr.mxu0 0.0
        %477 = vmatpush2.msra.mxu0 0.0
        %478 = vmatprep.subr.mxu0 0.0
        %479 = vmatpush2.msra.mxu0 0.0
        %480 = vmatprep.subr.mxu0 0.0
        %481 = vmatpush2.msra.mxu0 0.0
        %482 = vmatprep.subr.mxu0 0.0
        %483 = vmatpush2.msra.mxu0 0.0
        %484 = vmatprep.subr.mxu0 0.0
        %485 = vmatpush2.msra.mxu0 0.0
        %486 = vmatprep.subr.mxu0 0.0
        %487 = vmatpush2.msra.mxu0 0.0
        %488 = vmatprep.subr.mxu0 0.0
        %489 = vmatpush2.msra.mxu0 0.0
        %490 = vmatprep.mubr.f32.mxu0 0.0
        %491 = vmatmul.mubr.f32.gmra.mxu0 %v402
        %v492 = vpop.f32.mrf.mxu0
        %v493 = vadd.f32 %v424, %v492
        %v494 = vpop.f32.mrf.mxu0
        %495 = vdwg.mxu0
        %v496 = vmul.f32 %v493, 0.5
        %v497 = vmul.f32 %v493, 0.70710677
        %v498 = verf.f32.pop %v497
        %v499 = vadd.f32 %v498, 1.0
        %v500 = vmul.f32 %v496, %v499
        %v501 = vld [vmem:[#allocation3] sm:$0xff]
        %v502 = vld [vmem:[#allocation9] sm:$0xff]
        %v503 = vld [vmem:[#allocation9 + $0x8] sm:$0xff]
        %v504 = vld [vmem:[#allocation9 + $0x10] sm:$0xff]
        %v505 = vld [vmem:[#allocation9 + $0x18] sm:$0xff]
        %v506 = vld [vmem:[#allocation9 + $0x20] sm:$0xff]
        %v507 = vld [vmem:[#allocation9 + $0x28] sm:$0xff]
        %v508 = vld [vmem:[#allocation9 + $0x30] sm:$0xff]
        %v509 = vld [vmem:[#allocation9 + $0x38] sm:$0xff]
        %v510 = vld [vmem:[#allocation9 + $0x40] sm:$0xff]
        %v511 = vld [vmem:[#allocation9 + $0x48] sm:$0xff]
        %v512 = vld [vmem:[#allocation9 + $0x50] sm:$0xff]
        %v513 = vld [vmem:[#allocation9 + $0x58] sm:$0xff]
        %v514 = vld [vmem:[#allocation9 + $0x60] sm:$0xff]
        %v515 = vld [vmem:[#allocation9 + $0x68] sm:$0xff]
        %v516 = vld [vmem:[#allocation9 + $0x70] sm:$0xff]
        %v517 = vld [vmem:[#allocation9 + $0x78] sm:$0xff]
        %518 = vmatprep.subr.mxu0 0.0
        %519 = vmatpush1.msra.mxu0 %v517
        %520 = vmatprep.subr.mxu0 0.0
        %521 = vmatpush1.msra.mxu0 %v516
        %522 = vmatprep.subr.mxu0 0.0
        %523 = vmatpush1.msra.mxu0 %v515
        %524 = vmatprep.subr.mxu0 0.0
        %525 = vmatpush1.msra.mxu0 %v514
        %526 = vmatprep.subr.mxu0 0.0
        %527 = vmatpush1.msra.mxu0 %v513
        %528 = vmatprep.subr.mxu0 0.0
        %529 = vmatpush1.msra.mxu0 %v512
        %530 = vmatprep.subr.mxu0 0.0
        %531 = vmatpush1.msra.mxu0 %v511
        %532 = vmatprep.subr.mxu0 0.0
        %533 = vmatpush1.msra.mxu0 %v510
        %534 = vmatprep.subr.mxu0 0.0
        %535 = vmatpush1.msra.mxu0 %v509
        %536 = vmatprep.subr.mxu0 0.0
        %537 = vmatpush1.msra.mxu0 %v508
        %538 = vmatprep.subr.mxu0 0.0
        %539 = vmatpush1.msra.mxu0 %v507
        %540 = vmatprep.subr.mxu0 0.0
        %541 = vmatpush1.msra.mxu0 %v506
        %542 = vmatprep.subr.mxu0 0.0
        %543 = vmatpush1.msra.mxu0 %v505
        %544 = vmatprep.subr.mxu0 0.0
        %545 = vmatpush1.msra.mxu0 %v504
        %546 = vmatprep.subr.mxu0 0.0
        %547 = vmatpush1.msra.mxu0 %v503
        %548 = vmatprep.subr.mxu0 0.0
        %549 = vmatpush1.msra.mxu0 %v502
        %550 = vmatprep.subr.mxu0 0.0
        %551 = vmatpush2.msra.mxu0 0.0
        %552 = vmatprep.subr.mxu0 0.0
        %553 = vmatpush2.msra.mxu0 0.0
        %554 = vmatprep.subr.mxu0 0.0
        %555 = vmatpush2.msra.mxu0 0.0
        %556 = vmatprep.subr.mxu0 0.0
        %557 = vmatpush2.msra.mxu0 0.0
        %558 = vmatprep.subr.mxu0 0.0
        %559 = vmatpush2.msra.mxu0 0.0
        %560 = vmatprep.subr.mxu0 0.0
        %561 = vmatpush2.msra.mxu0 0.0
        %562 = vmatprep.subr.mxu0 0.0
        %563 = vmatpush2.msra.mxu0 0.0
        %564 = vmatprep.subr.mxu0 0.0
        %565 = vmatpush2.msra.mxu0 0.0
        %566 = vmatprep.subr.mxu0 0.0
        %567 = vmatpush2.msra.mxu0 0.0
        %568 = vmatprep.subr.mxu0 0.0
        %569 = vmatpush2.msra.mxu0 0.0
        %570 = vmatprep.subr.mxu0 0.0
        %571 = vmatpush2.msra.mxu0 0.0
        %572 = vmatprep.subr.mxu0 0.0
        %573 = vmatpush2.msra.mxu0 0.0
        %574 = vmatprep.subr.mxu0 0.0
        %575 = vmatpush2.msra.mxu0 0.0
        %576 = vmatprep.subr.mxu0 0.0
        %577 = vmatpush2.msra.mxu0 0.0
        %578 = vmatprep.subr.mxu0 0.0
        %579 = vmatpush2.msra.mxu0 0.0
        %580 = vmatprep.subr.mxu0 0.0
        %581 = vmatpush2.msra.mxu0 0.0
        %582 = vmatprep.mubr.f32.mxu0 0.0
        %583 = vmatmul.mubr.f32.gmra.mxu0 %v500
        %v584 = vpop.f32.mrf.mxu0
        %v585 = vadd.f32 0.0, %v584
        %v586 = vpop.f32.mrf.mxu0
        %587 = vdwg.mxu0
        %v588 = vadd.f32 %v501, %v585
        %589 = vst [vmem:[#allocation3] sm:$0xff] %v588
        // Predicated region
        $region65: #{tpu_custom_call.1} parent=47 // pred_check
          %p590 = pneg %p365
        $region66: #{tpu_custom_call.1} parent=47 // pred_check_branch
          %592 = sbr.rel (%p590) target = $region68
        $region67: #{tpu_custom_call.1} parent=47 // pred_region
          %v593 = vld [vmem:[#allocation3] sm:$0xff]
          %v594 = vld [vmem:[%s6] sm:$0x1]
          %v596 = vlaneseq
          %v597 = vshrl.u32 %v596, 7
          %v598 = vsub.s32 0, %v597
          %v599 = vrot.slane %v594, %v598
          %v601 = vadd.f32 %v593, %v599
          %v602 = vld [vmem:[#allocation2] sm:$0xff]
          %v603 = vadd.f32 %v602, %v601
          %604 = vst [vmem:[%s360] sm:$0xff] %v603
        $region68: #{tpu_custom_call.1} parent=47 // pred_fallthru
          _
        %s605 = sand.u32 %s212, 1
        %s606 = scalar_lea.sflag [#allocation6], %s605
        %s607 = sand.u32 %s212, 1
        %s608 = smul.addr %s607, 8
        %s609 = scalar_lea.vmem [#allocation10], %s608
        // Predicated region
        $region69: #{tpu_custom_call.1} parent=47 // pred_check
          %p610 = pneg %p222
        $region70: #{tpu_custom_call.1} parent=47 // pred_check_branch
          %612 = sbr.rel (%p610) target = $region72
        $region71: #{tpu_custom_call.1} parent=47 // pred_region
          %s614 = ssub.s32 128, 128
          %615 = vsyncadd %s606, %s614
          %s616 = smul.addr %s29, 128
          %s617 = scalar_lea.hbm %s7, %s616
          %s619 = sshll.u32 %s609, 4
          %s620 = int_to_ptr.vmem [resolvable:$true] %s619
          %622 = dma.vmem_to_hbm [thread:$0]  %s620, 128, %s617, %s606
        $region72: #{tpu_custom_call.1} parent=47 // pred_fallthru
          _
      $region48: #{tpu_custom_call.1} parent=5 // pred_fallthru
        _
      %p623 = scmp.le.s32.totalorder 2, %s20
      // Predicated region
      $region73: #{tpu_custom_call.1} parent=5 // pred_check
        %p624 = pneg %p623
      $region74: #{tpu_custom_call.1} parent=5 // pred_check_branch
        %626 = sbr.rel (%p624) target = $region76
      $region75: #{tpu_custom_call.1} parent=5 // pred_region
        %s627 = ssub.s32 %s20, 2
        // Predicated region
        $region77: #{tpu_custom_call.1} parent=75 // pred_check
          %p628 = pneg %p228
        $region78: #{tpu_custom_call.1} parent=75 // pred_check_branch
          %630 = sbr.rel (%p628) target = $region80
        $region79: #{tpu_custom_call.1} parent=75 // pred_region
          %s631 = sand.u32 %s213, 1
          %s632 = scalar_lea.sflag [#allocation6], %s631
          %s633 = sand.u32 %s213, 1
          %s634 = smul.addr %s633, 8
          %s635 = scalar_lea.vmem [#allocation10], %s634
          %636 = dma.done %s632, 128
        $region80: #{tpu_custom_call.1} parent=75 // pred_fallthru
          _
      $region76: #{tpu_custom_call.1} parent=5 // pred_fallthru
        _
    $region6: #{tpu_custom_call.1} parent=1 // loop_footer
      %s24 = sadd.s32 1, %s20
    $region7: #{tpu_custom_call.1} parent=1 // loop_footer_branch
      %19 = sbr.rel target = $region3
    $region8: #{tpu_custom_call.1} parent=1 // loop_exit
      _
    %637 = vsyncpa [#allocation5], 1
    %s638 = scalar_lea.sflag [#allocation5], 1
    %639 = vsyncpa %s638, 1
    %640 = vsyncpa [#allocation8], 1
    %641 = vsyncpa [#allocation6], 1
    %s642 = scalar_lea.sflag [#allocation6], 1
    %643 = vsyncpa %s642, 1

</llo_original>
